<compile_context>
chip_gen: v5e
topology: v5e:2x2
jax: 0.10.0
libtpu: 0.0.40
codegen_flags: <defaults>
</compile_context>

<pallas_src>
import functools
import math

import jax
import jax.numpy as jnp
import numpy as np
from jax.experimental import pallas as pl
from jax.experimental.pallas import tpu as pltpu


# ---------------------------------------------------------------------------
# shared math helpers (used inside kernels and by the pure-JAX reference)
# ---------------------------------------------------------------------------
def _layernorm(x, gamma, beta, eps=1e-5):
    mu = jnp.mean(x, axis=-1, keepdims=True)
    var = jnp.mean(jnp.square(x - mu), axis=-1, keepdims=True)
    return (x - mu) * jax.lax.rsqrt(var + eps) * gamma + beta


def _gelu_exact(x):
    # nn.GELU() default = exact erf-based GELU
    return 0.5 * x * (1.0 + jax.lax.erf(x * (1.0 / math.sqrt(2.0))))


# ---------------------------------------------------------------------------
# Fused per-stage Pallas kernel
# ---------------------------------------------------------------------------
def _stage_kernel(x_ref, vec_ref, wqkv_ref, bqkv_ref, wo_ref, w1_ref, b1_ref,
                  w2_ref, *rest,
                  num_heads, merge_ratio, apply_final_ln, block_batch, seq_len):
    if apply_final_ln:
        norm_ref, o_ref, acc_ref, heads_ref = rest
    else:
        norm_ref = None
        o_ref, acc_ref, heads_ref = rest

    l = pl.program_id(1)
    bf16, f32 = jnp.bfloat16, jnp.float32
    Bb, S = block_batch, seq_len

    # First layer of the stage for this batch block: load the input into the
    # resident activation buffer (it stays in VMEM for the whole stage).
    @pl.when(l == 0)
    def _():
        for b in range(Bb):                       # static, tiny
            acc_ref[b * S:(b + 1) * S, :] = x_ref[b].astype(f32)

    x = acc_ref[...]                              # (Bb*S, D) f32
    M, D = x.shape
    dh = D // num_heads

    vecs = vec_ref[0]                             # (6, D) f32
    ln1_g, ln1_b = vecs[0:1, :], vecs[1:2, :]
    bo = vecs[2:3, :]
    ln2_g, ln2_b = vecs[3:4, :], vecs[4:5, :]
    b2 = vecs[5:6, :]

    # ---- multi-head self-attention on LayerNorm1(x) ----
    xn = _layernorm(x, ln1_g, ln1_b)
    # QKV projection: bf16 inputs, f32 accumulation; weights pre-transposed and
    # the Q part pre-scaled by 1/sqrt(dh) host-side.
    qkv = jnp.dot(xn.astype(bf16), wqkv_ref[0],
                  preferred_element_type=f32) + bqkv_ref[0]        # (M, 3D)

    # Per head / per batch element: scores + softmax + (p @ v).  Each head's
    # result is written into its lane slice of heads_ref; the output
    # projection is then ONE K=D matmul (full MXU contraction depth).
    for h in range(num_heads):                    # static unroll (small)
        lo = h * dh
        for b in range(Bb):
            r0 = b * S
            qh = qkv[r0:r0 + S, lo:lo + dh].astype(bf16)
            kh = qkv[r0:r0 + S, D + lo:D + lo + dh].astype(bf16)
            vh = qkv[r0:r0 + S, 2 * D + lo:2 * D + lo + dh].astype(bf16)
            s = jax.lax.dot_general(qh, kh, (((1,), (1,)), ((), ())),
                                    preferred_element_type=f32)    # (S, S)
            s = s - jnp.max(s, axis=-1, keepdims=True)
            p = jnp.exp(s)
            p = p * pl.reciprocal(jnp.sum(p, axis=-1, keepdims=True), approx=True)
            heads_ref[r0:r0 + S, lo:lo + dh] = jnp.dot(
                p.astype(bf16), vh, preferred_element_type=f32)    # (S, dh)

    attn = jnp.dot(heads_ref[...].astype(bf16), wo_ref[0],
                   preferred_element_type=f32)                     # (M, D)
    x = x + attn + bo                             # residual 1 (+ W_o bias)

    # ---- MLP on LayerNorm2(x) ----
    xn2 = _layernorm(x, ln2_g, ln2_b)
    h1 = jnp.dot(xn2.astype(bf16), w1_ref[0], preferred_element_type=f32) + b1_ref[0]
    h1 = _gelu_exact(h1)
    mlp = jnp.dot(h1.astype(bf16), w2_ref[0], preferred_element_type=f32) + b2
    acc_ref[...] = x + mlp                        # residual 2, stays in VMEM

    # ---- last layer of the stage: fused token merge (+ final LayerNorm) ----
    @pl.when(l == pl.num_programs(1) - 1)
    def _():
        s_out = S // merge_ratio
        m_out = Bb * s_out
        if merge_ratio == 1:
            merged = acc_ref[...]
        else:
            # group-sum of consecutive tokens: strided VMEM reads + VPU adds.
            # The flattened (Bb*S) row layout keeps batch groups aligned since
            # S % merge_ratio == 0.
            merged = acc_ref[pl.ds(0, m_out, stride=merge_ratio), :]
            for j in range(1, merge_ratio):
                merged = merged + acc_ref[pl.ds(j, m_out, stride=merge_ratio), :]
        if apply_final_ln:
            nv = norm_ref[...]                    # (2, D)
            merged = _layernorm(merged, nv[0:1, :], nv[1:2, :])
        for b in range(Bb):
            o_ref[b] = merged[b * s_out:(b + 1) * s_out, :].astype(o_ref.dtype)


# ---------------------------------------------------------------------------
# pallas_call wrapper
# ---------------------------------------------------------------------------
def _pick_batch_block(B, S, D, budget_bytes=24 << 20):
    """Largest divisor of B whose resident activations stay under budget
    (conservative so it also fits v7x's 64 MiB VMEM with headroom)."""
    per_b = S * D * 4 * 6      # acc + heads scratch + (double-buffered) in/out blocks
    bb = max(1, min(B, budget_bytes // max(per_b, 1)))
    while B % bb:
        bb -= 1
    return bb


def _stage_forward(x, sp, num_heads, merge_ratio, apply_final_ln, norm_gb):
    B, S, D = x.shape
    L = int(sp["wqkv_t"].shape[0])
    Hm = int(sp["w1_t"].shape[2])
    s_out = S // merge_ratio

    Bb = _pick_batch_block(B, S, D)
    grid = (B // Bb, L)

    weights = [sp["vecs"], sp["wqkv_t"], sp["bqkv"], sp["wo_t"],
               sp["w1_t"], sp["b1"], sp["w2_t"]]
    args = [x] + list(weights)

    in_specs = [pl.BlockSpec((Bb, S, D), lambda b, l: (b, 0, 0))]
    for w in weights:
        nd = w.ndim
        in_specs.append(pl.BlockSpec((1,) + tuple(w.shape[1:]),
                                     lambda b, l, _nd=nd: (l,) + (0,) * (_nd - 1)))
    if apply_final_ln:
        args.append(norm_gb)
        in_specs.append(pl.BlockSpec(norm_gb.shape, lambda b, l: (0, 0)))

    # --- VMEM budget: double-buffered per-layer weights + blocks + scratch ---
    def nbytes(a):
        return int(a.size) * a.dtype.itemsize

    per_layer_bytes = sum(nbytes(w) for w in weights) // L
    vmem_est = (2 * per_layer_bytes
                + 2 * Bb * S * D * 4            # x block (double-buffered)
                + 2 * Bb * s_out * D * 4        # out block
                + 2 * Bb * S * D * 4            # acc + heads scratch
                + Bb * S * (3 * D + Hm) * 4)    # qkv / mlp intermediates (rough)
    vmem_limit = int(min(max(int(vmem_est * 1.5) + (4 << 20), 32 << 20), 100 << 20))

    # --- advisory cost estimate for XLA's scheduler ---
    flops = int(L * B * (8 * S * D * D + 4 * S * S * D + 4 * S * D * Hm))
    transcendentals = int(L * B * (num_heads * S * S + S * Hm))
    bytes_accessed = int((B // Bb) * L * per_layer_bytes
                         + B * S * D * 4 + B * s_out * D * 4)
    cost = pl.CostEstimate(flops=flops, transcendentals=transcendentals,
                           bytes_accessed=bytes_accessed)

    kernel = functools.partial(_stage_kernel, num_heads=num_heads,
                               merge_ratio=merge_ratio,
                               apply_final_ln=apply_final_ln,
                               block_batch=Bb, seq_len=S)

    return pl.pallas_call(
        kernel,
        out_shape=jax.ShapeDtypeStruct((B, s_out, D), x.dtype),
        grid=grid,
        in_specs=in_specs,
        out_specs=pl.BlockSpec((Bb, s_out, D), lambda b, l: (b, 0, 0)),
        scratch_shapes=[pltpu.VMEM((Bb * S, D), jnp.float32),   # resident activation
                        pltpu.VMEM((Bb * S, D), jnp.float32)],  # head-concat buffer
        compiler_params=pltpu.CompilerParams(
            dimension_semantics=("parallel", "arbitrary"),
            vmem_limit_bytes=vmem_limit),
        cost_estimate=cost,
    )(*args)


def hierarchical_transformer(x, params, num_heads, merge_ratios):
    n_stages = len(params["stages"])
    for i, (sp, r) in enumerate(zip(params["stages"], merge_ratios)):
        x = _stage_forward(x, sp, num_heads, r,
                           apply_final_ln=(i == n_stages - 1),
                           norm_gb=params["norm_gb"])
    return x


# ---------------------------------------------------------------------------
# Deterministic parameter initialization (PyTorch weight layout) + host-side
# preparation for the kernel (stack / fuse / transpose / fold scale / bf16 cast).
# ---------------------------------------------------------------------------
def init_block_params(key, dim, hidden):
    ks = jax.random.split(key, 8)
    f32 = jnp.float32
    return {
        "ln1_g": jnp.ones((dim,), f32),
        "ln1_b": jnp.zeros((dim,), f32),
        "wqkv": jax.random.normal(ks[0], (3 * dim, dim), f32) * (1.0 / math.sqrt(dim)),
        "bqkv": jax.random.normal(ks[1], (3 * dim,), f32) * 0.02,
        "wo": jax.random.normal(ks[2], (dim, dim), f32) * math.sqrt(2.0 / dim),
        "bo": jax.random.normal(ks[3], (dim,), f32) * 0.02,
        "ln2_g": jnp.ones((dim,), f32),
        "ln2_b": jnp.zeros((dim,), f32),
        "w1": jax.random.normal(ks[4], (hidden, dim), f32) * math.sqrt(2.0 / dim),
        "b1": jax.random.normal(ks[5], (hidden,), f32) * 0.02,
        "w2": jax.random.normal(ks[6], (dim, hidden), f32) * math.sqrt(2.0 / hidden),
        "b2": jax.random.normal(ks[7], (dim,), f32) * 0.02,
    }


def init_params(key, dim, hidden, depth_stages):
    stages = []
    for depth in depth_stages:
        blocks = []
        for _ in range(depth):
            key, sub = jax.random.split(key)
            blocks.append(init_block_params(sub, dim, hidden))
        stages.append(blocks)
    return {
        "stages": stages,
        "norm_g": jnp.ones((dim,), jnp.float32),
        "norm_b": jnp.zeros((dim,), jnp.float32),
    }


def prepare_params(raw, num_heads):
    """Stack per-layer params per stage, fuse small per-layer vectors into one
    (L, 6, D) array, pre-transpose weights to (in, out), fold 1/sqrt(head_dim)
    into the Q projection, and cast ALL matmul weights (incl. Wo) to bf16."""
    bf16, f32 = jnp.bfloat16, jnp.float32
    stages = []
    for blocks in raw["stages"]:
        D = blocks[0]["wqkv"].shape[1]
        dh = D // num_heads
        scale_vec = jnp.concatenate(
            [jnp.full((D,), 1.0 / math.sqrt(dh), f32), jnp.ones((2 * D,), f32)])

        def stack(fn):
            return jnp.stack([fn(b) for b in blocks])

        stages.append({
            # fused D-wide per-layer vectors: rows = ln1_g, ln1_b, bo, ln2_g, ln2_b, b2
            "vecs": stack(lambda b: jnp.stack(
                [b["ln1_g"], b["ln1_b"], b["bo"], b["ln2_g"], b["ln2_b"], b["b2"]],
                axis=0)),
            "wqkv_t": stack(lambda b: (b["wqkv"].T * scale_vec[None, :]).astype(bf16)),
            "bqkv": stack(lambda b: (b["bqkv"] * scale_vec).reshape(1, -1)),
            "wo_t": stack(lambda b: b["wo"].T.astype(bf16)),
            "w1_t": stack(lambda b: b["w1"].T.astype(bf16)),
            "b1": stack(lambda b: b["b1"].reshape(1, -1)),
            "w2_t": stack(lambda b: b["w2"].T.astype(bf16)),
        })
    return {"stages": stages,
            "norm_gb": jnp.stack([raw["norm_g"], raw["norm_b"]], axis=0)}


# ---------------------------------------------------------------------------
# Pure-JAX f32 reference (same math as the PyTorch module, no Pallas)
# ---------------------------------------------------------------------------
def _block_ref(x, p, num_heads):
    B, S, D = x.shape
    dh = D // num_heads
    xn = _layernorm(x, p["ln1_g"], p["ln1_b"])
    qkv = jnp.einsum("bsd,ed->bse", xn, p["wqkv"]) + p["bqkv"]
    q, k, v = jnp.split(qkv, 3, axis=-1)
    q = q.reshape(B, S, num_heads, dh) / math.sqrt(dh)
    k = k.reshape(B, S, num_heads, dh)
    v = v.reshape(B, S, num_heads, dh)
    s = jnp.einsum("bqhd,bkhd->bhqk", q, k)
    a = jax.nn.softmax(s, axis=-1)
    o = jnp.einsum("bhqk,bkhd->bqhd", a, v).reshape(B, S, D)
    attn = jnp.einsum("bsd,ed->bse", o, p["wo"]) + p["bo"]
    x = x + attn
    xn2 = _layernorm(x, p["ln2_g"], p["ln2_b"])
    h1 = _gelu_exact(jnp.einsum("bsd,hd->bsh", xn2, p["w1"]) + p["b1"])
    mlp = jnp.einsum("bsh,dh->bsd", h1, p["w2"]) + p["b2"]
    return x + mlp


def _model_ref(x, params, num_heads, merge_ratios):
    for stage_blocks, r in zip(params["stages"], merge_ratios):
        for bp in stage_blocks:
            x = _block_ref(x, bp, num_heads)
        B, S, D = x.shape
        x = x.reshape(B, S // r, r, D).sum(axis=2)
    return _layernorm(x, params["norm_g"], params["norm_b"])


# ---------------------------------------------------------------------------
if __name__ == "__main__":
    # config: embed_dim=32, num_heads=4, merge_ratios=[2,2], depth_stages=[1,1]
    embed_dim = 32
    num_heads = 4
    merge_ratios = [2, 2]
    depth_stages = [1, 1]
    mlp_ratio = 4.0
    hidden = int(embed_dim * mlp_ratio)

    B, S = 2, 8  # seq must be divisible by prod(merge_ratios)

    key = jax.random.PRNGKey(0)
    kx, kp = jax.random.split(key)
    x = jax.random.normal(kx, (B, S, embed_dim), jnp.float32)
    raw_params = init_params(kp, embed_dim, hidden, depth_stages)
    params = prepare_params(raw_params, num_heads)

    out = hierarchical_transformer(x, params, num_heads, merge_ratios)
    out = jax.block_until_ready(out)

    expected_seq = S // int(np.prod(merge_ratios))
    assert out.shape == (B, expected_seq, embed_dim), out.shape

    # Reference is pure f32; the kernel uses bf16 matmul inputs (f32 accumulation)
    # and an approximate EUP reciprocal, so compare at bf16-appropriate tolerance.
    ref = jax.block_until_ready(_model_ref(x, raw_params, num_heads, merge_ratios))
    np.testing.assert_allclose(np.asarray(out), np.asarray(ref), rtol=3e-2, atol=3e-2)

    print("KERNEL_OK")
</pallas_src>

<mosaic_0001>
module attributes {stable_mosaic.version = 11 : i64} {
  func.func @_stage_kernel(%arg0: i32, %arg1: i32, %arg2: memref<2x8x32xf32, #tpu.memory_space<vmem>>, %arg3: memref<1x6x32xf32, #tpu.memory_space<vmem>>, %arg4: memref<1x32x96xbf16, #tpu.memory_space<vmem>>, %arg5: memref<1x1x96xf32, #tpu.memory_space<vmem>>, %arg6: memref<1x32x32xbf16, #tpu.memory_space<vmem>>, %arg7: memref<1x32x128xbf16, #tpu.memory_space<vmem>>, %arg8: memref<1x1x128xf32, #tpu.memory_space<vmem>>, %arg9: memref<1x128x32xbf16, #tpu.memory_space<vmem>>, %arg10: memref<2x4x32xf32, #tpu.memory_space<vmem>>, %arg11: memref<16x32xf32, #tpu.memory_space<vmem>>, %arg12: memref<16x32xf32, #tpu.memory_space<vmem>>) attributes {dimension_semantics = [#tpu.dimension_semantics<parallel>, #tpu.dimension_semantics<arbitrary>], iteration_bounds = array<i64: 1, 1>, scalar_prefetch = 0 : i64, scratch_operands = 2 : i64, tpu.core_type = #tpu.core_type<tc>, window_params = [{transform_indices = @transform_0, window_bounds = array<i64: 2, 8, 32>}, {transform_indices = @transform_1, window_bounds = array<i64: 1, 6, 32>}, {transform_indices = @transform_2, window_bounds = array<i64: 1, 32, 96>}, {transform_indices = @transform_3, window_bounds = array<i64: 1, 1, 96>}, {transform_indices = @transform_4, window_bounds = array<i64: 1, 32, 32>}, {transform_indices = @transform_5, window_bounds = array<i64: 1, 32, 128>}, {transform_indices = @transform_6, window_bounds = array<i64: 1, 1, 128>}, {transform_indices = @transform_7, window_bounds = array<i64: 1, 128, 32>}, {transform_indices = @transform_8, window_bounds = array<i64: 2, 4, 32>}]} {
    %c0_i32 = arith.constant 0 : i32
    %0 = arith.cmpi eq, %arg1, %c0_i32 : i32
    %1 = arith.extui %0 : i1 to i32
    %c0_i32_0 = arith.constant 0 : i32
    %2 = arith.cmpi ne, %1, %c0_i32_0 : i32
    scf.if %2 {
      %c0_90 = arith.constant 0 : index
      %c0_91 = arith.constant 0 : index
      %c0_92 = arith.constant 0 : index
      %259 = vector.load %arg2[%c0_90, %c0_91, %c0_92] : memref<2x8x32xf32, #tpu.memory_space<vmem>>, vector<1x8x32xf32>
      %260 = vector.shape_cast %259 : vector<1x8x32xf32> to vector<8x32xf32>
      %c0_93 = arith.constant 0 : index
      %c0_94 = arith.constant 0 : index
      %261 = vector.load %arg11[%c0_93, %c0_94] : memref<16x32xf32, #tpu.memory_space<vmem>>, vector<8x32xf32>
      tpu.vector_store %arg11[%c0_93, %c0_94], %260 {strides = array<i32>} : memref<16x32xf32, #tpu.memory_space<vmem>>, vector<8x32xf32>,
      %c1 = arith.constant 1 : index
      %c0_95 = arith.constant 0 : index
      %c0_96 = arith.constant 0 : index
      %262 = vector.load %arg2[%c1, %c0_95, %c0_96] : memref<2x8x32xf32, #tpu.memory_space<vmem>>, vector<1x8x32xf32>
      %263 = vector.shape_cast %262 : vector<1x8x32xf32> to vector<8x32xf32>
      %c8_97 = arith.constant 8 : index
      %c0_98 = arith.constant 0 : index
      %264 = vector.load %arg11[%c8_97, %c0_98] : memref<16x32xf32, #tpu.memory_space<vmem>>, vector<8x32xf32>
      tpu.vector_store %arg11[%c8_97, %c0_98], %263 {strides = array<i32>} : memref<16x32xf32, #tpu.memory_space<vmem>>, vector<8x32xf32>,
    } else {
    }
    %c0 = arith.constant 0 : index
    %c0_1 = arith.constant 0 : index
    %3 = vector.load %arg11[%c0, %c0_1] : memref<16x32xf32, #tpu.memory_space<vmem>>, vector<16x32xf32>
    %c0_2 = arith.constant 0 : index
    %c0_3 = arith.constant 0 : index
    %c0_4 = arith.constant 0 : index
    %4 = vector.load %arg3[%c0_2, %c0_3, %c0_4] : memref<1x6x32xf32, #tpu.memory_space<vmem>>, vector<1x6x32xf32>
    %5 = vector.shape_cast %4 : vector<1x6x32xf32> to vector<6x32xf32>
    %6 = vector.extract_strided_slice %5 {offsets = [0, 0], sizes = [1, 32], strides = [1, 1]} : vector<6x32xf32> to vector<1x32xf32>
    %7 = vector.extract_strided_slice %5 {offsets = [1, 0], sizes = [1, 32], strides = [1, 1]} : vector<6x32xf32> to vector<1x32xf32>
    %8 = vector.extract_strided_slice %5 {offsets = [2, 0], sizes = [1, 32], strides = [1, 1]} : vector<6x32xf32> to vector<1x32xf32>
    %9 = vector.extract_strided_slice %5 {offsets = [3, 0], sizes = [1, 32], strides = [1, 1]} : vector<6x32xf32> to vector<1x32xf32>
    %10 = vector.extract_strided_slice %5 {offsets = [4, 0], sizes = [1, 32], strides = [1, 1]} : vector<6x32xf32> to vector<1x32xf32>
    %11 = vector.extract_strided_slice %5 {offsets = [5, 0], sizes = [1, 32], strides = [1, 1]} : vector<6x32xf32> to vector<1x32xf32>
    %cst = arith.constant dense<0.000000e+00> : vector<16xf32>
    %12 = vector.multi_reduction <add>, %3, %cst [1] : vector<16x32xf32> to vector<16xf32>
    %13 = vector.shape_cast %12 : vector<16xf32> to vector<16x1xf32>
    %cst_5 = arith.constant 3.200000e+01 : f32
    %14 = vector.broadcast %cst_5 : f32 to vector<16x1xf32>
    %15 = arith.divf %13, %14 : vector<16x1xf32>
    %16 = vector.broadcast %15 : vector<16x1xf32> to vector<16x32xf32>
    %17 = arith.subf %3, %16 : vector<16x32xf32>
    %18 = arith.mulf %17, %17 : vector<16x32xf32>
    %cst_6 = arith.constant dense<0.000000e+00> : vector<16xf32>
    %19 = vector.multi_reduction <add>, %18, %cst_6 [1] : vector<16x32xf32> to vector<16xf32>
    %20 = vector.shape_cast %19 : vector<16xf32> to vector<16x1xf32>
    %cst_7 = arith.constant 3.200000e+01 : f32
    %21 = vector.broadcast %cst_7 : f32 to vector<16x1xf32>
    %22 = arith.divf %20, %21 : vector<16x1xf32>
    %23 = vector.broadcast %15 : vector<16x1xf32> to vector<16x32xf32>
    %24 = arith.subf %3, %23 : vector<16x32xf32>
    %cst_8 = arith.constant 9.99999974E-6 : f32
    %25 = vector.broadcast %cst_8 : f32 to vector<16x1xf32>
    %26 = arith.addf %22, %25 : vector<16x1xf32>
    %27 = math.rsqrt %26 : vector<16x1xf32>
    %28 = vector.broadcast %27 : vector<16x1xf32> to vector<16x32xf32>
    %29 = arith.mulf %24, %28 : vector<16x32xf32>
    %30 = vector.broadcast %6 : vector<1x32xf32> to vector<16x32xf32>
    %31 = arith.mulf %29, %30 : vector<16x32xf32>
    %32 = vector.broadcast %7 : vector<1x32xf32> to vector<16x32xf32>
    %33 = arith.addf %31, %32 : vector<16x32xf32>
    %34 = arith.truncf %33 : vector<16x32xf32> to vector<16x32xbf16>
    %c0_9 = arith.constant 0 : index
    %c0_10 = arith.constant 0 : index
    %c0_11 = arith.constant 0 : index
    %35 = vector.load %arg4[%c0_9, %c0_10, %c0_11] : memref<1x32x96xbf16, #tpu.memory_space<vmem>>, vector<1x32x96xbf16>
    %36 = vector.shape_cast %35 : vector<1x32x96xbf16> to vector<32x96xbf16>
    %cst_12 = arith.constant dense<0.000000e+00> : vector<16x96xf32>
    %37 = tpu.matmul %34, %36, %cst_12 {dimension_numbers = #tpu.dot_dimension_numbers<[1], [0], [0], [1], [0, 0, 1, 1], [], []>} : vector<16x32xbf16>, vector<32x96xbf16>, vector<16x96xf32> -> vector<16x96xf32>
    %c0_13 = arith.constant 0 : index
    %c0_14 = arith.constant 0 : index
    %c0_15 = arith.constant 0 : index
    %38 = vector.load %arg5[%c0_13, %c0_14, %c0_15] : memref<1x1x96xf32, #tpu.memory_space<vmem>>, vector<1x1x96xf32>
    %39 = vector.shape_cast %38 : vector<1x1x96xf32> to vector<1x96xf32>
    %40 = vector.broadcast %39 : vector<1x96xf32> to vector<16x96xf32>
    %41 = arith.addf %37, %40 : vector<16x96xf32>
    %42 = vector.extract_strided_slice %41 {offsets = [0, 0], sizes = [8, 8], strides = [1, 1]} : vector<16x96xf32> to vector<8x8xf32>
    %43 = arith.truncf %42 : vector<8x8xf32> to vector<8x8xbf16>
    %44 = vector.extract_strided_slice %41 {offsets = [0, 32], sizes = [8, 8], strides = [1, 1]} : vector<16x96xf32> to vector<8x8xf32>
    %45 = arith.truncf %44 : vector<8x8xf32> to vector<8x8xbf16>
    %46 = vector.extract_strided_slice %41 {offsets = [0, 64], sizes = [8, 8], strides = [1, 1]} : vector<16x96xf32> to vector<8x8xf32>
    %47 = arith.truncf %46 : vector<8x8xf32> to vector<8x8xbf16>
    %cst_16 = arith.constant dense<0.000000e+00> : vector<8x8xf32>
    %48 = tpu.matmul %43, %45, %cst_16 {dimension_numbers = #tpu.dot_dimension_numbers<[1], [1], [0], [0], [0, 0, 1, 0], [], []>} : vector<8x8xbf16>, vector<8x8xbf16>, vector<8x8xf32> -> vector<8x8xf32>
    %cst_17 = arith.constant dense<0xFF800000> : vector<8xf32>
    %49 = vector.multi_reduction <maximumf>, %48, %cst_17 [1] : vector<8x8xf32> to vector<8xf32>
    %50 = vector.shape_cast %49 : vector<8xf32> to vector<8x1xf32>
    %51 = vector.broadcast %50 : vector<8x1xf32> to vector<8x8xf32>
    %52 = arith.subf %48, %51 : vector<8x8xf32>
    %53 = math.exp %52 : vector<8x8xf32>
    %cst_18 = arith.constant dense<0.000000e+00> : vector<8xf32>
    %54 = vector.multi_reduction <add>, %53, %cst_18 [1] : vector<8x8xf32> to vector<8xf32>
    %55 = vector.shape_cast %54 : vector<8xf32> to vector<8x1xf32>
    %56 = tpu.reciprocal %55 {approx = true} : vector<8x1xf32> -> vector<8x1xf32>
    %57 = vector.broadcast %56 : vector<8x1xf32> to vector<8x8xf32>
    %58 = arith.mulf %53, %57 : vector<8x8xf32>
    %59 = arith.truncf %58 : vector<8x8xf32> to vector<8x8xbf16>
    %cst_19 = arith.constant dense<0.000000e+00> : vector<8x8xf32>
    %60 = tpu.matmul %59, %47, %cst_19 {dimension_numbers = #tpu.dot_dimension_numbers<[1], [0], [0], [1], [0, 0, 1, 1], [], []>} : vector<8x8xbf16>, vector<8x8xbf16>, vector<8x8xf32> -> vector<8x8xf32>
    %c0_20 = arith.constant 0 : index
    %c0_21 = arith.constant 0 : index
    %61 = vector.load %arg12[%c0_20, %c0_21] : memref<16x32xf32, #tpu.memory_space<vmem>>, vector<8x8xf32>
    tpu.vector_store %arg12[%c0_20, %c0_21], %60 {strides = array<i32>} : memref<16x32xf32, #tpu.memory_space<vmem>>, vector<8x8xf32>,
    %62 = vector.extract_strided_slice %41 {offsets = [8, 0], sizes = [8, 8], strides = [1, 1]} : vector<16x96xf32> to vector<8x8xf32>
    %63 = arith.truncf %62 : vector<8x8xf32> to vector<8x8xbf16>
    %64 = vector.extract_strided_slice %41 {offsets = [8, 32], sizes = [8, 8], strides = [1, 1]} : vector<16x96xf32> to vector<8x8xf32>
    %65 = arith.truncf %64 : vector<8x8xf32> to vector<8x8xbf16>
    %66 = vector.extract_strided_slice %41 {offsets = [8, 64], sizes = [8, 8], strides = [1, 1]} : vector<16x96xf32> to vector<8x8xf32>
    %67 = arith.truncf %66 : vector<8x8xf32> to vector<8x8xbf16>
    %cst_22 = arith.constant dense<0.000000e+00> : vector<8x8xf32>
    %68 = tpu.matmul %63, %65, %cst_22 {dimension_numbers = #tpu.dot_dimension_numbers<[1], [1], [0], [0], [0, 0, 1, 0], [], []>} : vector<8x8xbf16>, vector<8x8xbf16>, vector<8x8xf32> -> vector<8x8xf32>
    %cst_23 = arith.constant dense<0xFF800000> : vector<8xf32>
    %69 = vector.multi_reduction <maximumf>, %68, %cst_23 [1] : vector<8x8xf32> to vector<8xf32>
    %70 = vector.shape_cast %69 : vector<8xf32> to vector<8x1xf32>
    %71 = vector.broadcast %70 : vector<8x1xf32> to vector<8x8xf32>
    %72 = arith.subf %68, %71 : vector<8x8xf32>
    %73 = math.exp %72 : vector<8x8xf32>
    %cst_24 = arith.constant dense<0.000000e+00> : vector<8xf32>
    %74 = vector.multi_reduction <add>, %73, %cst_24 [1] : vector<8x8xf32> to vector<8xf32>
    %75 = vector.shape_cast %74 : vector<8xf32> to vector<8x1xf32>
    %76 = tpu.reciprocal %75 {approx = true} : vector<8x1xf32> -> vector<8x1xf32>
    %77 = vector.broadcast %76 : vector<8x1xf32> to vector<8x8xf32>
    %78 = arith.mulf %73, %77 : vector<8x8xf32>
    %79 = arith.truncf %78 : vector<8x8xf32> to vector<8x8xbf16>
    %cst_25 = arith.constant dense<0.000000e+00> : vector<8x8xf32>
    %80 = tpu.matmul %79, %67, %cst_25 {dimension_numbers = #tpu.dot_dimension_numbers<[1], [0], [0], [1], [0, 0, 1, 1], [], []>} : vector<8x8xbf16>, vector<8x8xbf16>, vector<8x8xf32> -> vector<8x8xf32>
    %c8 = arith.constant 8 : index
    %c0_26 = arith.constant 0 : index
    %81 = vector.load %arg12[%c8, %c0_26] : memref<16x32xf32, #tpu.memory_space<vmem>>, vector<8x8xf32>
    tpu.vector_store %arg12[%c8, %c0_26], %80 {strides = array<i32>} : memref<16x32xf32, #tpu.memory_space<vmem>>, vector<8x8xf32>,
    %82 = vector.extract_strided_slice %41 {offsets = [0, 8], sizes = [8, 8], strides = [1, 1]} : vector<16x96xf32> to vector<8x8xf32>
    %83 = arith.truncf %82 : vector<8x8xf32> to vector<8x8xbf16>
    %84 = vector.extract_strided_slice %41 {offsets = [0, 40], sizes = [8, 8], strides = [1, 1]} : vector<16x96xf32> to vector<8x8xf32>
    %85 = arith.truncf %84 : vector<8x8xf32> to vector<8x8xbf16>
    %86 = vector.extract_strided_slice %41 {offsets = [0, 72], sizes = [8, 8], strides = [1, 1]} : vector<16x96xf32> to vector<8x8xf32>
    %87 = arith.truncf %86 : vector<8x8xf32> to vector<8x8xbf16>
    %cst_27 = arith.constant dense<0.000000e+00> : vector<8x8xf32>
    %88 = tpu.matmul %83, %85, %cst_27 {dimension_numbers = #tpu.dot_dimension_numbers<[1], [1], [0], [0], [0, 0, 1, 0], [], []>} : vector<8x8xbf16>, vector<8x8xbf16>, vector<8x8xf32> -> vector<8x8xf32>
    %cst_28 = arith.constant dense<0xFF800000> : vector<8xf32>
    %89 = vector.multi_reduction <maximumf>, %88, %cst_28 [1] : vector<8x8xf32> to vector<8xf32>
    %90 = vector.shape_cast %89 : vector<8xf32> to vector<8x1xf32>
    %91 = vector.broadcast %90 : vector<8x1xf32> to vector<8x8xf32>
    %92 = arith.subf %88, %91 : vector<8x8xf32>
    %93 = math.exp %92 : vector<8x8xf32>
    %cst_29 = arith.constant dense<0.000000e+00> : vector<8xf32>
    %94 = vector.multi_reduction <add>, %93, %cst_29 [1] : vector<8x8xf32> to vector<8xf32>
    %95 = vector.shape_cast %94 : vector<8xf32> to vector<8x1xf32>
    %96 = tpu.reciprocal %95 {approx = true} : vector<8x1xf32> -> vector<8x1xf32>
    %97 = vector.broadcast %96 : vector<8x1xf32> to vector<8x8xf32>
    %98 = arith.mulf %93, %97 : vector<8x8xf32>
    %99 = arith.truncf %98 : vector<8x8xf32> to vector<8x8xbf16>
    %cst_30 = arith.constant dense<0.000000e+00> : vector<8x8xf32>
    %100 = tpu.matmul %99, %87, %cst_30 {dimension_numbers = #tpu.dot_dimension_numbers<[1], [0], [0], [1], [0, 0, 1, 1], [], []>} : vector<8x8xbf16>, vector<8x8xbf16>, vector<8x8xf32> -> vector<8x8xf32>
    %c0_31 = arith.constant 0 : index
    %c8_32 = arith.constant 8 : index
    %101 = vector.load %arg12[%c0_31, %c8_32] : memref<16x32xf32, #tpu.memory_space<vmem>>, vector<8x8xf32>
    tpu.vector_store %arg12[%c0_31, %c8_32], %100 {strides = array<i32>} : memref<16x32xf32, #tpu.memory_space<vmem>>, vector<8x8xf32>,
    %102 = vector.extract_strided_slice %41 {offsets = [8, 8], sizes = [8, 8], strides = [1, 1]} : vector<16x96xf32> to vector<8x8xf32>
    %103 = arith.truncf %102 : vector<8x8xf32> to vector<8x8xbf16>
    %104 = vector.extract_strided_slice %41 {offsets = [8, 40], sizes = [8, 8], strides = [1, 1]} : vector<16x96xf32> to vector<8x8xf32>
    %105 = arith.truncf %104 : vector<8x8xf32> to vector<8x8xbf16>
    %106 = vector.extract_strided_slice %41 {offsets = [8, 72], sizes = [8, 8], strides = [1, 1]} : vector<16x96xf32> to vector<8x8xf32>
    %107 = arith.truncf %106 : vector<8x8xf32> to vector<8x8xbf16>
    %cst_33 = arith.constant dense<0.000000e+00> : vector<8x8xf32>
    %108 = tpu.matmul %103, %105, %cst_33 {dimension_numbers = #tpu.dot_dimension_numbers<[1], [1], [0], [0], [0, 0, 1, 0], [], []>} : vector<8x8xbf16>, vector<8x8xbf16>, vector<8x8xf32> -> vector<8x8xf32>
    %cst_34 = arith.constant dense<0xFF800000> : vector<8xf32>
    %109 = vector.multi_reduction <maximumf>, %108, %cst_34 [1] : vector<8x8xf32> to vector<8xf32>
    %110 = vector.shape_cast %109 : vector<8xf32> to vector<8x1xf32>
    %111 = vector.broadcast %110 : vector<8x1xf32> to vector<8x8xf32>
    %112 = arith.subf %108, %111 : vector<8x8xf32>
    %113 = math.exp %112 : vector<8x8xf32>
    %cst_35 = arith.constant dense<0.000000e+00> : vector<8xf32>
    %114 = vector.multi_reduction <add>, %113, %cst_35 [1] : vector<8x8xf32> to vector<8xf32>
    %115 = vector.shape_cast %114 : vector<8xf32> to vector<8x1xf32>
    %116 = tpu.reciprocal %115 {approx = true} : vector<8x1xf32> -> vector<8x1xf32>
    %117 = vector.broadcast %116 : vector<8x1xf32> to vector<8x8xf32>
    %118 = arith.mulf %113, %117 : vector<8x8xf32>
    %119 = arith.truncf %118 : vector<8x8xf32> to vector<8x8xbf16>
    %cst_36 = arith.constant dense<0.000000e+00> : vector<8x8xf32>
    %120 = tpu.matmul %119, %107, %cst_36 {dimension_numbers = #tpu.dot_dimension_numbers<[1], [0], [0], [1], [0, 0, 1, 1], [], []>} : vector<8x8xbf16>, vector<8x8xbf16>, vector<8x8xf32> -> vector<8x8xf32>
    %c8_37 = arith.constant 8 : index
    %c8_38 = arith.constant 8 : index
    %121 = vector.load %arg12[%c8_37, %c8_38] : memref<16x32xf32, #tpu.memory_space<vmem>>, vector<8x8xf32>
    tpu.vector_store %arg12[%c8_37, %c8_38], %120 {strides = array<i32>} : memref<16x32xf32, #tpu.memory_space<vmem>>, vector<8x8xf32>,
    %122 = vector.extract_strided_slice %41 {offsets = [0, 16], sizes = [8, 8], strides = [1, 1]} : vector<16x96xf32> to vector<8x8xf32>
    %123 = arith.truncf %122 : vector<8x8xf32> to vector<8x8xbf16>
    %124 = vector.extract_strided_slice %41 {offsets = [0, 48], sizes = [8, 8], strides = [1, 1]} : vector<16x96xf32> to vector<8x8xf32>
    %125 = arith.truncf %124 : vector<8x8xf32> to vector<8x8xbf16>
    %126 = vector.extract_strided_slice %41 {offsets = [0, 80], sizes = [8, 8], strides = [1, 1]} : vector<16x96xf32> to vector<8x8xf32>
    %127 = arith.truncf %126 : vector<8x8xf32> to vector<8x8xbf16>
    %cst_39 = arith.constant dense<0.000000e+00> : vector<8x8xf32>
    %128 = tpu.matmul %123, %125, %cst_39 {dimension_numbers = #tpu.dot_dimension_numbers<[1], [1], [0], [0], [0, 0, 1, 0], [], []>} : vector<8x8xbf16>, vector<8x8xbf16>, vector<8x8xf32> -> vector<8x8xf32>
    %cst_40 = arith.constant dense<0xFF800000> : vector<8xf32>
    %129 = vector.multi_reduction <maximumf>, %128, %cst_40 [1] : vector<8x8xf32> to vector<8xf32>
    %130 = vector.shape_cast %129 : vector<8xf32> to vector<8x1xf32>
    %131 = vector.broadcast %130 : vector<8x1xf32> to vector<8x8xf32>
    %132 = arith.subf %128, %131 : vector<8x8xf32>
    %133 = math.exp %132 : vector<8x8xf32>
    %cst_41 = arith.constant dense<0.000000e+00> : vector<8xf32>
    %134 = vector.multi_reduction <add>, %133, %cst_41 [1] : vector<8x8xf32> to vector<8xf32>
    %135 = vector.shape_cast %134 : vector<8xf32> to vector<8x1xf32>
    %136 = tpu.reciprocal %135 {approx = true} : vector<8x1xf32> -> vector<8x1xf32>
    %137 = vector.broadcast %136 : vector<8x1xf32> to vector<8x8xf32>
    %138 = arith.mulf %133, %137 : vector<8x8xf32>
    %139 = arith.truncf %138 : vector<8x8xf32> to vector<8x8xbf16>
    %cst_42 = arith.constant dense<0.000000e+00> : vector<8x8xf32>
    %140 = tpu.matmul %139, %127, %cst_42 {dimension_numbers = #tpu.dot_dimension_numbers<[1], [0], [0], [1], [0, 0, 1, 1], [], []>} : vector<8x8xbf16>, vector<8x8xbf16>, vector<8x8xf32> -> vector<8x8xf32>
    %c0_43 = arith.constant 0 : index
    %c16 = arith.constant 16 : index
    %141 = vector.load %arg12[%c0_43, %c16] : memref<16x32xf32, #tpu.memory_space<vmem>>, vector<8x8xf32>
    tpu.vector_store %arg12[%c0_43, %c16], %140 {strides = array<i32>} : memref<16x32xf32, #tpu.memory_space<vmem>>, vector<8x8xf32>,
    %142 = vector.extract_strided_slice %41 {offsets = [8, 16], sizes = [8, 8], strides = [1, 1]} : vector<16x96xf32> to vector<8x8xf32>
    %143 = arith.truncf %142 : vector<8x8xf32> to vector<8x8xbf16>
    %144 = vector.extract_strided_slice %41 {offsets = [8, 48], sizes = [8, 8], strides = [1, 1]} : vector<16x96xf32> to vector<8x8xf32>
    %145 = arith.truncf %144 : vector<8x8xf32> to vector<8x8xbf16>
    %146 = vector.extract_strided_slice %41 {offsets = [8, 80], sizes = [8, 8], strides = [1, 1]} : vector<16x96xf32> to vector<8x8xf32>
    %147 = arith.truncf %146 : vector<8x8xf32> to vector<8x8xbf16>
    %cst_44 = arith.constant dense<0.000000e+00> : vector<8x8xf32>
    %148 = tpu.matmul %143, %145, %cst_44 {dimension_numbers = #tpu.dot_dimension_numbers<[1], [1], [0], [0], [0, 0, 1, 0], [], []>} : vector<8x8xbf16>, vector<8x8xbf16>, vector<8x8xf32> -> vector<8x8xf32>
    %cst_45 = arith.constant dense<0xFF800000> : vector<8xf32>
    %149 = vector.multi_reduction <maximumf>, %148, %cst_45 [1] : vector<8x8xf32> to vector<8xf32>
    %150 = vector.shape_cast %149 : vector<8xf32> to vector<8x1xf32>
    %151 = vector.broadcast %150 : vector<8x1xf32> to vector<8x8xf32>
    %152 = arith.subf %148, %151 : vector<8x8xf32>
    %153 = math.exp %152 : vector<8x8xf32>
    %cst_46 = arith.constant dense<0.000000e+00> : vector<8xf32>
    %154 = vector.multi_reduction <add>, %153, %cst_46 [1] : vector<8x8xf32> to vector<8xf32>
    %155 = vector.shape_cast %154 : vector<8xf32> to vector<8x1xf32>
    %156 = tpu.reciprocal %155 {approx = true} : vector<8x1xf32> -> vector<8x1xf32>
    %157 = vector.broadcast %156 : vector<8x1xf32> to vector<8x8xf32>
    %158 = arith.mulf %153, %157 : vector<8x8xf32>
    %159 = arith.truncf %158 : vector<8x8xf32> to vector<8x8xbf16>
    %cst_47 = arith.constant dense<0.000000e+00> : vector<8x8xf32>
    %160 = tpu.matmul %159, %147, %cst_47 {dimension_numbers = #tpu.dot_dimension_numbers<[1], [0], [0], [1], [0, 0, 1, 1], [], []>} : vector<8x8xbf16>, vector<8x8xbf16>, vector<8x8xf32> -> vector<8x8xf32>
    %c8_48 = arith.constant 8 : index
    %c16_49 = arith.constant 16 : index
    %161 = vector.load %arg12[%c8_48, %c16_49] : memref<16x32xf32, #tpu.memory_space<vmem>>, vector<8x8xf32>
    tpu.vector_store %arg12[%c8_48, %c16_49], %160 {strides = array<i32>} : memref<16x32xf32, #tpu.memory_space<vmem>>, vector<8x8xf32>,
    %162 = vector.extract_strided_slice %41 {offsets = [0, 24], sizes = [8, 8], strides = [1, 1]} : vector<16x96xf32> to vector<8x8xf32>
    %163 = arith.truncf %162 : vector<8x8xf32> to vector<8x8xbf16>
    %164 = vector.extract_strided_slice %41 {offsets = [0, 56], sizes = [8, 8], strides = [1, 1]} : vector<16x96xf32> to vector<8x8xf32>
    %165 = arith.truncf %164 : vector<8x8xf32> to vector<8x8xbf16>
    %166 = vector.extract_strided_slice %41 {offsets = [0, 88], sizes = [8, 8], strides = [1, 1]} : vector<16x96xf32> to vector<8x8xf32>
    %167 = arith.truncf %166 : vector<8x8xf32> to vector<8x8xbf16>
    %cst_50 = arith.constant dense<0.000000e+00> : vector<8x8xf32>
    %168 = tpu.matmul %163, %165, %cst_50 {dimension_numbers = #tpu.dot_dimension_numbers<[1], [1], [0], [0], [0, 0, 1, 0], [], []>} : vector<8x8xbf16>, vector<8x8xbf16>, vector<8x8xf32> -> vector<8x8xf32>
    %cst_51 = arith.constant dense<0xFF800000> : vector<8xf32>
    %169 = vector.multi_reduction <maximumf>, %168, %cst_51 [1] : vector<8x8xf32> to vector<8xf32>
    %170 = vector.shape_cast %169 : vector<8xf32> to vector<8x1xf32>
    %171 = vector.broadcast %170 : vector<8x1xf32> to vector<8x8xf32>
    %172 = arith.subf %168, %171 : vector<8x8xf32>
    %173 = math.exp %172 : vector<8x8xf32>
    %cst_52 = arith.constant dense<0.000000e+00> : vector<8xf32>
    %174 = vector.multi_reduction <add>, %173, %cst_52 [1] : vector<8x8xf32> to vector<8xf32>
    %175 = vector.shape_cast %174 : vector<8xf32> to vector<8x1xf32>
    %176 = tpu.reciprocal %175 {approx = true} : vector<8x1xf32> -> vector<8x1xf32>
    %177 = vector.broadcast %176 : vector<8x1xf32> to vector<8x8xf32>
    %178 = arith.mulf %173, %177 : vector<8x8xf32>
    %179 = arith.truncf %178 : vector<8x8xf32> to vector<8x8xbf16>
    %cst_53 = arith.constant dense<0.000000e+00> : vector<8x8xf32>
    %180 = tpu.matmul %179, %167, %cst_53 {dimension_numbers = #tpu.dot_dimension_numbers<[1], [0], [0], [1], [0, 0, 1, 1], [], []>} : vector<8x8xbf16>, vector<8x8xbf16>, vector<8x8xf32> -> vector<8x8xf32>
    %c0_54 = arith.constant 0 : index
    %c24 = arith.constant 24 : index
    %181 = vector.load %arg12[%c0_54, %c24] : memref<16x32xf32, #tpu.memory_space<vmem>>, vector<8x8xf32>
    tpu.vector_store %arg12[%c0_54, %c24], %180 {strides = array<i32>} : memref<16x32xf32, #tpu.memory_space<vmem>>, vector<8x8xf32>,
    %182 = vector.extract_strided_slice %41 {offsets = [8, 24], sizes = [8, 8], strides = [1, 1]} : vector<16x96xf32> to vector<8x8xf32>
    %183 = arith.truncf %182 : vector<8x8xf32> to vector<8x8xbf16>
    %184 = vector.extract_strided_slice %41 {offsets = [8, 56], sizes = [8, 8], strides = [1, 1]} : vector<16x96xf32> to vector<8x8xf32>
    %185 = arith.truncf %184 : vector<8x8xf32> to vector<8x8xbf16>
    %186 = vector.extract_strided_slice %41 {offsets = [8, 88], sizes = [8, 8], strides = [1, 1]} : vector<16x96xf32> to vector<8x8xf32>
    %187 = arith.truncf %186 : vector<8x8xf32> to vector<8x8xbf16>
    %cst_55 = arith.constant dense<0.000000e+00> : vector<8x8xf32>
    %188 = tpu.matmul %183, %185, %cst_55 {dimension_numbers = #tpu.dot_dimension_numbers<[1], [1], [0], [0], [0, 0, 1, 0], [], []>} : vector<8x8xbf16>, vector<8x8xbf16>, vector<8x8xf32> -> vector<8x8xf32>
    %cst_56 = arith.constant dense<0xFF800000> : vector<8xf32>
    %189 = vector.multi_reduction <maximumf>, %188, %cst_56 [1] : vector<8x8xf32> to vector<8xf32>
    %190 = vector.shape_cast %189 : vector<8xf32> to vector<8x1xf32>
    %191 = vector.broadcast %190 : vector<8x1xf32> to vector<8x8xf32>
    %192 = arith.subf %188, %191 : vector<8x8xf32>
    %193 = math.exp %192 : vector<8x8xf32>
    %cst_57 = arith.constant dense<0.000000e+00> : vector<8xf32>
    %194 = vector.multi_reduction <add>, %193, %cst_57 [1] : vector<8x8xf32> to vector<8xf32>
    %195 = vector.shape_cast %194 : vector<8xf32> to vector<8x1xf32>
    %196 = tpu.reciprocal %195 {approx = true} : vector<8x1xf32> -> vector<8x1xf32>
    %197 = vector.broadcast %196 : vector<8x1xf32> to vector<8x8xf32>
    %198 = arith.mulf %193, %197 : vector<8x8xf32>
    %199 = arith.truncf %198 : vector<8x8xf32> to vector<8x8xbf16>
    %cst_58 = arith.constant dense<0.000000e+00> : vector<8x8xf32>
    %200 = tpu.matmul %199, %187, %cst_58 {dimension_numbers = #tpu.dot_dimension_numbers<[1], [0], [0], [1], [0, 0, 1, 1], [], []>} : vector<8x8xbf16>, vector<8x8xbf16>, vector<8x8xf32> -> vector<8x8xf32>
    %c8_59 = arith.constant 8 : index
    %c24_60 = arith.constant 24 : index
    %201 = vector.load %arg12[%c8_59, %c24_60] : memref<16x32xf32, #tpu.memory_space<vmem>>, vector<8x8xf32>
    tpu.vector_store %arg12[%c8_59, %c24_60], %200 {strides = array<i32>} : memref<16x32xf32, #tpu.memory_space<vmem>>, vector<8x8xf32>,
    %c0_61 = arith.constant 0 : index
    %c0_62 = arith.constant 0 : index
    %202 = vector.load %arg12[%c0_61, %c0_62] : memref<16x32xf32, #tpu.memory_space<vmem>>, vector<16x32xf32>
    %203 = arith.truncf %202 : vector<16x32xf32> to vector<16x32xbf16>
    %c0_63 = arith.constant 0 : index
    %c0_64 = arith.constant 0 : index
    %c0_65 = arith.constant 0 : index
    %204 = vector.load %arg6[%c0_63, %c0_64, %c0_65] : memref<1x32x32xbf16, #tpu.memory_space<vmem>>, vector<1x32x32xbf16>
    %205 = vector.shape_cast %204 : vector<1x32x32xbf16> to vector<32x32xbf16>
    %cst_66 = arith.constant dense<0.000000e+00> : vector<16x32xf32>
    %206 = tpu.matmul %203, %205, %cst_66 {dimension_numbers = #tpu.dot_dimension_numbers<[1], [0], [0], [1], [0, 0, 1, 1], [], []>} : vector<16x32xbf16>, vector<32x32xbf16>, vector<16x32xf32> -> vector<16x32xf32>
    %207 = arith.addf %3, %206 : vector<16x32xf32>
    %208 = vector.broadcast %8 : vector<1x32xf32> to vector<16x32xf32>
    %209 = arith.addf %207, %208 : vector<16x32xf32>
    %cst_67 = arith.constant dense<0.000000e+00> : vector<16xf32>
    %210 = vector.multi_reduction <add>, %209, %cst_67 [1] : vector<16x32xf32> to vector<16xf32>
    %211 = vector.shape_cast %210 : vector<16xf32> to vector<16x1xf32>
    %cst_68 = arith.constant 3.200000e+01 : f32
    %212 = vector.broadcast %cst_68 : f32 to vector<16x1xf32>
    %213 = arith.divf %211, %212 : vector<16x1xf32>
    %214 = vector.broadcast %213 : vector<16x1xf32> to vector<16x32xf32>
    %215 = arith.subf %209, %214 : vector<16x32xf32>
    %216 = arith.mulf %215, %215 : vector<16x32xf32>
    %cst_69 = arith.constant dense<0.000000e+00> : vector<16xf32>
    %217 = vector.multi_reduction <add>, %216, %cst_69 [1] : vector<16x32xf32> to vector<16xf32>
    %218 = vector.shape_cast %217 : vector<16xf32> to vector<16x1xf32>
    %cst_70 = arith.constant 3.200000e+01 : f32
    %219 = vector.broadcast %cst_70 : f32 to vector<16x1xf32>
    %220 = arith.divf %218, %219 : vector<16x1xf32>
    %221 = vector.broadcast %213 : vector<16x1xf32> to vector<16x32xf32>
    %222 = arith.subf %209, %221 : vector<16x32xf32>
    %cst_71 = arith.constant 9.99999974E-6 : f32
    %223 = vector.broadcast %cst_71 : f32 to vector<16x1xf32>
    %224 = arith.addf %220, %223 : vector<16x1xf32>
    %225 = math.rsqrt %224 : vector<16x1xf32>
    %226 = vector.broadcast %225 : vector<16x1xf32> to vector<16x32xf32>
    %227 = arith.mulf %222, %226 : vector<16x32xf32>
    %228 = vector.broadcast %9 : vector<1x32xf32> to vector<16x32xf32>
    %229 = arith.mulf %227, %228 : vector<16x32xf32>
    %230 = vector.broadcast %10 : vector<1x32xf32> to vector<16x32xf32>
    %231 = arith.addf %229, %230 : vector<16x32xf32>
    %232 = arith.truncf %231 : vector<16x32xf32> to vector<16x32xbf16>
    %c0_72 = arith.constant 0 : index
    %c0_73 = arith.constant 0 : index
    %c0_74 = arith.constant 0 : index
    %233 = vector.load %arg7[%c0_72, %c0_73, %c0_74] : memref<1x32x128xbf16, #tpu.memory_space<vmem>>, vector<1x32x128xbf16>
    %234 = vector.shape_cast %233 : vector<1x32x128xbf16> to vector<32x128xbf16>
    %cst_75 = arith.constant dense<0.000000e+00> : vector<16x128xf32>
    %235 = tpu.matmul %232, %234, %cst_75 {dimension_numbers = #tpu.dot_dimension_numbers<[1], [0], [0], [1], [0, 0, 1, 1], [], []>} : vector<16x32xbf16>, vector<32x128xbf16>, vector<16x128xf32> -> vector<16x128xf32>
    %c0_76 = arith.constant 0 : index
    %c0_77 = arith.constant 0 : index
    %c0_78 = arith.constant 0 : index
    %236 = vector.load %arg8[%c0_76, %c0_77, %c0_78] : memref<1x1x128xf32, #tpu.memory_space<vmem>>, vector<1x1x128xf32>
    %237 = vector.shape_cast %236 : vector<1x1x128xf32> to vector<1x128xf32>
    %238 = vector.broadcast %237 : vector<1x128xf32> to vector<16x128xf32>
    %239 = arith.addf %235, %238 : vector<16x128xf32>
    %cst_79 = arith.constant 5.000000e-01 : f32
    %240 = vector.broadcast %cst_79 : f32 to vector<16x128xf32>
    %241 = arith.mulf %240, %239 : vector<16x128xf32>
    %cst_80 = arith.constant 0.707106769 : f32
    %242 = vector.broadcast %cst_80 : f32 to vector<16x128xf32>
    %243 = arith.mulf %239, %242 : vector<16x128xf32>
    %244 = math.erf %243 : vector<16x128xf32>
    %cst_81 = arith.constant 1.000000e+00 : f32
    %245 = vector.broadcast %cst_81 : f32 to vector<16x128xf32>
    %246 = arith.addf %245, %244 : vector<16x128xf32>
    %247 = arith.mulf %241, %246 : vector<16x128xf32>
    %248 = arith.truncf %247 : vector<16x128xf32> to vector<16x128xbf16>
    %c0_82 = arith.constant 0 : index
    %c0_83 = arith.constant 0 : index
    %c0_84 = arith.constant 0 : index
    %249 = vector.load %arg9[%c0_82, %c0_83, %c0_84] : memref<1x128x32xbf16, #tpu.memory_space<vmem>>, vector<1x128x32xbf16>
    %250 = vector.shape_cast %249 : vector<1x128x32xbf16> to vector<128x32xbf16>
    %cst_85 = arith.constant dense<0.000000e+00> : vector<16x32xf32>
    %251 = tpu.matmul %248, %250, %cst_85 {dimension_numbers = #tpu.dot_dimension_numbers<[1], [0], [0], [1], [0, 0, 1, 1], [], []>} : vector<16x128xbf16>, vector<128x32xbf16>, vector<16x32xf32> -> vector<16x32xf32>
    %252 = vector.broadcast %11 : vector<1x32xf32> to vector<16x32xf32>
    %253 = arith.addf %251, %252 : vector<16x32xf32>
    %254 = arith.addf %209, %253 : vector<16x32xf32>
    %c0_86 = arith.constant 0 : index
    %c0_87 = arith.constant 0 : index
    %255 = vector.load %arg11[%c0_86, %c0_87] : memref<16x32xf32, #tpu.memory_space<vmem>>, vector<16x32xf32>
    tpu.vector_store %arg11[%c0_86, %c0_87], %254 {strides = array<i32>} : memref<16x32xf32, #tpu.memory_space<vmem>>, vector<16x32xf32>,
    %c0_i32_88 = arith.constant 0 : i32
    %256 = arith.cmpi eq, %arg1, %c0_i32_88 : i32
    %257 = arith.extui %256 : i1 to i32
    %c0_i32_89 = arith.constant 0 : i32
    %258 = arith.cmpi ne, %257, %c0_i32_89 : i32
    scf.if %258 {
      %c0_90 = arith.constant 0 : index
      %c0_91 = arith.constant 0 : index
      %259 = tpu.strided_load %arg11[%c0_90, %c0_91] {strides = array<i32: 2, 1>} : memref<16x32xf32, #tpu.memory_space<vmem>>, vector<8x32xf32>
      %c1 = arith.constant 1 : index
      %c0_92 = arith.constant 0 : index
      %260 = tpu.strided_load %arg11[%c1, %c0_92] {strides = array<i32: 2, 1>} : memref<16x32xf32, #tpu.memory_space<vmem>>, vector<8x32xf32>
      %261 = arith.addf %259, %260 : vector<8x32xf32>
      %262 = vector.extract_strided_slice %261 {offsets = [0, 0], sizes = [4, 32], strides = [1, 1]} : vector<8x32xf32> to vector<4x32xf32>
      %c0_93 = arith.constant 0 : index
      %c0_94 = arith.constant 0 : index
      %c0_95 = arith.constant 0 : index
      %263 = vector.load %arg10[%c0_93, %c0_94, %c0_95] : memref<2x4x32xf32, #tpu.memory_space<vmem>>, vector<1x4x32xf32>
      %264 = vector.shape_cast %263 : vector<1x4x32xf32> to vector<4x32xf32>
      %265 = vector.shape_cast %262 : vector<4x32xf32> to vector<1x4x32xf32>
      tpu.vector_store %arg10[%c0_93, %c0_94, %c0_95], %265 {strides = array<i32>} : memref<2x4x32xf32, #tpu.memory_space<vmem>>, vector<1x4x32xf32>,
      %266 = vector.extract_strided_slice %261 {offsets = [4, 0], sizes = [4, 32], strides = [1, 1]} : vector<8x32xf32> to vector<4x32xf32>
      %c1_96 = arith.constant 1 : index
      %c0_97 = arith.constant 0 : index
      %c0_98 = arith.constant 0 : index
      %267 = vector.load %arg10[%c1_96, %c0_97, %c0_98] : memref<2x4x32xf32, #tpu.memory_space<vmem>>, vector<1x4x32xf32>
      %268 = vector.shape_cast %267 : vector<1x4x32xf32> to vector<4x32xf32>
      %269 = vector.shape_cast %266 : vector<4x32xf32> to vector<1x4x32xf32>
      tpu.vector_store %arg10[%c1_96, %c0_97, %c0_98], %269 {strides = array<i32>} : memref<2x4x32xf32, #tpu.memory_space<vmem>>, vector<1x4x32xf32>,
    } else {
    }
    return
  }
  func.func @transform_0(%arg0: i32, %arg1: i32) -> (i32, i32, i32) {
    %c0_i32 = arith.constant 0 : i32
    %c0_i32_0 = arith.constant 0 : i32
    %c0_i32_1 = arith.constant 0 : i32
    return %arg0, %c0_i32, %c0_i32_0 : i32, i32, i32
  }
  func.func @transform_1(%arg0: i32, %arg1: i32) -> (i32, i32, i32) {
    %c0_i32 = arith.constant 0 : i32
    %c0_i32_0 = arith.constant 0 : i32
    %c0_i32_1 = arith.constant 0 : i32
    return %arg1, %c0_i32, %c0_i32_0 : i32, i32, i32
  }
  func.func @transform_2(%arg0: i32, %arg1: i32) -> (i32, i32, i32) {
    %c0_i32 = arith.constant 0 : i32
    %c0_i32_0 = arith.constant 0 : i32
    %c0_i32_1 = arith.constant 0 : i32
    return %arg1, %c0_i32, %c0_i32_0 : i32, i32, i32
  }
  func.func @transform_3(%arg0: i32, %arg1: i32) -> (i32, i32, i32) {
    %c0_i32 = arith.constant 0 : i32
    %c0_i32_0 = arith.constant 0 : i32
    %c0_i32_1 = arith.constant 0 : i32
    return %arg1, %c0_i32, %c0_i32_0 : i32, i32, i32
  }
  func.func @transform_4(%arg0: i32, %arg1: i32) -> (i32, i32, i32) {
    %c0_i32 = arith.constant 0 : i32
    %c0_i32_0 = arith.constant 0 : i32
    %c0_i32_1 = arith.constant 0 : i32
    return %arg1, %c0_i32, %c0_i32_0 : i32, i32, i32
  }
  func.func @transform_5(%arg0: i32, %arg1: i32) -> (i32, i32, i32) {
    %c0_i32 = arith.constant 0 : i32
    %c0_i32_0 = arith.constant 0 : i32
    %c0_i32_1 = arith.constant 0 : i32
    return %arg1, %c0_i32, %c0_i32_0 : i32, i32, i32
  }
  func.func @transform_6(%arg0: i32, %arg1: i32) -> (i32, i32, i32) {
    %c0_i32 = arith.constant 0 : i32
    %c0_i32_0 = arith.constant 0 : i32
    %c0_i32_1 = arith.constant 0 : i32
    return %arg1, %c0_i32, %c0_i32_0 : i32, i32, i32
  }
  func.func @transform_7(%arg0: i32, %arg1: i32) -> (i32, i32, i32) {
    %c0_i32 = arith.constant 0 : i32
    %c0_i32_0 = arith.constant 0 : i32
    %c0_i32_1 = arith.constant 0 : i32
    return %arg1, %c0_i32, %c0_i32_0 : i32, i32, i32
  }
  func.func @transform_8(%arg0: i32, %arg1: i32) -> (i32, i32, i32) {
    %c0_i32 = arith.constant 0 : i32
    %c0_i32_0 = arith.constant 0 : i32
    %c0_i32_1 = arith.constant 0 : i32
    return %arg0, %c0_i32, %c0_i32_0 : i32, i32, i32
  }
}

</mosaic_0001>

<llo_original>
// kernel: tpu_custom_call.1
$region0: #{tpu_custom_call.1}
  #allocation0 [shape = 'u32[]', space=smem, size = 0x4, offset = 0x4, fixed_abs, tag = 'smem constant byte address 0x4 - core index']
  #allocation1 [shape = 'u32[72,128]{1,0:T(1,128)}', space=vmem, size = 0x9000, scoped, tag = 'internal scratch']
  #allocation2 [shape = 'f32[16,32]{1,0:T(8,128)}', space=vmem, size = 0x2000, scoped, tag = 'scratch operand']
  #allocation3 [shape = 'f32[16,32]{1,0:T(8,128)}', space=vmem, size = 0x2000, scoped, tag = 'scratch operand']
  %s0 = inlined_call_operand.vmem [shape: f32[2,8,32], index: 0, kind: input, shape index: {}]
  %s1 = inlined_call_operand.vmem [shape: f32[1,6,32], index: 1, kind: input, shape index: {}]
  %s2 = inlined_call_operand.vmem [shape: bf16[1,32,96], index: 2, kind: input, shape index: {}]
  %s3 = inlined_call_operand.vmem [shape: f32[1,1,96], index: 3, kind: input, shape index: {}]
  %s4 = inlined_call_operand.vmem [shape: bf16[1,32,32], index: 4, kind: input, shape index: {}]
  %s5 = inlined_call_operand.vmem [shape: bf16[1,32,128], index: 5, kind: input, shape index: {}]
  %s6 = inlined_call_operand.vmem [shape: f32[1,1,128], index: 6, kind: input, shape index: {}]
  %s7 = inlined_call_operand.vmem [shape: bf16[1,128,32], index: 7, kind: input, shape index: {}]
  %s8 = inlined_call_operand.hbm [shape: f32[2,4,32], index: 8, kind: output, shape index: {}]
  %s9 = sld [smem:[#allocation0]]
  $region50: #{tpu_custom_call.1} parent=0
    _
  %s11 = ssub.s32 1, %s9
  %s12 = scalar_select 0, %s11, %s9
  $region1: #{tpu_custom_call.1} parent=0
    #allocation4 [shape = 'u8[4096]{0}', space=vmem, size = 0x1000, scoped, tag = 'output window, operand 0, single buffered']
    #allocation5 [shape = 's32[1]{0}', space=sflag, size = 0x4, scoped, tag = 'scoped memory for tpu_custom_call.1']
    %13 = vsyncpa [#allocation5], 0
    // Predicated region
    $region2: #{tpu_custom_call.1} parent=1 // pred_check
      _
    $region3: #{tpu_custom_call.1} parent=1 // pred_check_branch
      %15 = sbr.rel (0) target = $region5
    $region4: #{tpu_custom_call.1} parent=1 // pred_region
      _
    $region5: #{tpu_custom_call.1} parent=1 // pred_fallthru
      _
    // Predicated region
    $region6: #{tpu_custom_call.1} parent=1 // pred_check
      _
    $region7: #{tpu_custom_call.1} parent=1 // pred_check_branch
      %17 = sbr.rel (0) target = $region9
    $region8: #{tpu_custom_call.1} parent=1 // pred_region
      _
    $region9: #{tpu_custom_call.1} parent=1 // pred_fallthru
      _
    // Predicated region
    $region10: #{tpu_custom_call.1} parent=1 // pred_check
      _
    $region11: #{tpu_custom_call.1} parent=1 // pred_check_branch
      %19 = sbr.rel (0) target = $region13
    $region12: #{tpu_custom_call.1} parent=1 // pred_region
      _
    $region13: #{tpu_custom_call.1} parent=1 // pred_fallthru
      _
    // Predicated region
    $region14: #{tpu_custom_call.1} parent=1 // pred_check
      _
    $region15: #{tpu_custom_call.1} parent=1 // pred_check_branch
      %21 = sbr.rel (0) target = $region17
    $region16: #{tpu_custom_call.1} parent=1 // pred_region
      _
    $region17: #{tpu_custom_call.1} parent=1 // pred_fallthru
      _
    // Predicated region
    $region18: #{tpu_custom_call.1} parent=1 // pred_check
      _
    $region19: #{tpu_custom_call.1} parent=1 // pred_check_branch
      %23 = sbr.rel (0) target = $region21
    $region20: #{tpu_custom_call.1} parent=1 // pred_region
      _
    $region21: #{tpu_custom_call.1} parent=1 // pred_fallthru
      _
    // Predicated region
    $region22: #{tpu_custom_call.1} parent=1 // pred_check
      _
    $region23: #{tpu_custom_call.1} parent=1 // pred_check_branch
      %25 = sbr.rel (0) target = $region25
    $region24: #{tpu_custom_call.1} parent=1 // pred_region
      _
    $region25: #{tpu_custom_call.1} parent=1 // pred_fallthru
      _
    // Predicated region
    $region26: #{tpu_custom_call.1} parent=1 // pred_check
      _
    $region27: #{tpu_custom_call.1} parent=1 // pred_check_branch
      %27 = sbr.rel (0) target = $region29
    $region28: #{tpu_custom_call.1} parent=1 // pred_region
      _
    $region29: #{tpu_custom_call.1} parent=1 // pred_fallthru
      _
    // Predicated region
    $region30: #{tpu_custom_call.1} parent=1 // pred_check
      _
    $region31: #{tpu_custom_call.1} parent=1 // pred_check_branch
      %29 = sbr.rel (0) target = $region33
    $region32: #{tpu_custom_call.1} parent=1 // pred_region
      _
    $region33: #{tpu_custom_call.1} parent=1 // pred_fallthru
      _
    %p31 = scmp.eq.s32.totalorder 0, 0
    // Predicated region
    $region34: #{tpu_custom_call.1} parent=1 // pred_check
      %p32 = pneg %p31
    $region35: #{tpu_custom_call.1} parent=1 // pred_check_branch
      %34 = sbr.rel (%p32) target = $region37
    $region36: #{tpu_custom_call.1} parent=1 // pred_region
      %v35 = vld [vmem:[%s0] sm:$0xff]
      %vm36 = vcmask 261120
      %37 = vst.msk [vmem:[#allocation2] sm:$0xff] %vm36, %v35
      %s38 = scalar_lea.vmem %s0, 8
      %v39 = vld [vmem:[%s38] sm:$0xff]
      %40 = vst.msk [vmem:[#allocation2 + $0x8] sm:$0xff] %vm36, %v39
    $region37: #{tpu_custom_call.1} parent=1 // pred_fallthru
      _
    %v41 = vld [vmem:[#allocation2] sm:$0xff]
    %v42 = vld [vmem:[#allocation2 + $0x8] sm:$0xff]
    %v43 = vld [vmem:[%s1] sm:$0x3f]
    %vm44 = vcmask 261120
    %v45 = vsel %vm44, %v41, 0.0
    %46 = vadd.xlane.f32.xlu0 %v45
    %v47 = vpop.xlane.xlu0 %46
    %v48 = vsel %vm44, %v42, 0.0
    %49 = vadd.xlane.f32.xlu0 %v48
    %v50 = vpop.xlane.xlu0 %49
    %v51 = vrcp.pop 32.0
    %v52 = vmul.f32 32.0, %v51
    %v53 = vsub.f32 1.0, %v52
    %v54 = vmul.f32 %v51, %v53
    %v55 = vadd.f32 %v51, %v54
    %vm56 = vweird.f32 %v51
    %v57 = vsel %vm56, %v51, %v55
    %v58 = vmul.f32 %v47, %v57
    %v59 = vmul.f32 %v50, %v57
    %v60 = vsub.f32 %v41, %v58
    %v61 = vsub.f32 %v42, %v59
    %v62 = vmul.f32 %v60, %v60
    %v63 = vmul.f32 %v61, %v61
    %v64 = vsel %vm44, %v62, 0.0
    %65 = vadd.xlane.f32.xlu0 %v64
    %v66 = vpop.xlane.xlu0 %65
    %v67 = vsel %vm44, %v63, 0.0
    %68 = vadd.xlane.f32.xlu0 %v67
    %v69 = vpop.xlane.xlu0 %68
    %v70 = vmul.f32 %v66, %v57
    %v71 = vmul.f32 %v69, %v57
    %v72 = vadd.f32 %v70, 1e-05
    %v73 = vadd.f32 %v71, 1e-05
    %v74 = vrsqrt.pop %v72
    %v75 = vmul.f32 %v74, %v72
    %v76 = vmul.f32 %v75, %v74
    %v77 = vmul.f32 0.5, %v76
    %v78 = vsub.f32 1.5, %v77
    %v79 = vmul.f32 %v74, %v78
    %vm80 = vweird.f32 %v72
    %vm81 = vweird.f32 %v74
    %vm82 = vmor %vm80, %vm81
    %v83 = vsel %vm82, %v74, %v79
    %v84 = vrsqrt.pop %v73
    %v85 = vmul.f32 %v84, %v73
    %v86 = vmul.f32 %v85, %v84
    %v87 = vmul.f32 0.5, %v86
    %v88 = vsub.f32 1.5, %v87
    %v89 = vmul.f32 %v84, %v88
    %vm90 = vweird.f32 %v73
    %vm91 = vweird.f32 %v84
    %vm92 = vmor %vm90, %vm91
    %v93 = vsel %vm92, %v84, %v89
    %v94 = vmul.f32 %v60, %v83
    %v95 = vmul.f32 %v61, %v93
    %v96 = vperm.slane %v43, 0
    %v97 = vmul.f32 %v94, %v96
    %v98 = vmul.f32 %v95, %v96
    %v99 = vperm.slane %v43, 1
    %v100 = vadd.f32 %v97, %v99
    %v101 = vadd.f32 %v98, %v99
    %v102 = vpack.c.bf16 %v101, %v100
    %v103 = vld [vmem:[%s2] sm:$0xf]
    %v104 = vld [vmem:[%s2 + $0x4] sm:$0xf]
    %v105 = vld [vmem:[%s2 + $0x8] sm:$0xf]
    %v106 = vld [vmem:[%s2 + $0xc] sm:$0xf]
    %v107 = vld [vmem:[%s3] sm:$0x1]
    %v109 = vperm.slane %v107, 0
    %v115 = vunpack.c.l.b16 %v103
    %v116 = vunpack.c.l.b16 %v104
    %v117 = vunpack.c.l.b16 %v105
    %v118 = vunpack.c.l.b16 %v106
    %v119 = vpack.c.b16 %v116, %v115
    %v120 = vpack.c.b16 %v118, %v117
    %v124 = vsel %vm44, %v102, 0
    %126 = vmatpush.bf16.msra.mxu0 0
    %127 = vmatpush.bf16.msra.mxu0 0
    %128 = vmatpush.bf16.msra.mxu0 0
    %129 = vmatpush.bf16.msra.mxu0 0
    %130 = vmatpush.bf16.msra.mxu0 0
    %131 = vmatpush.bf16.msra.mxu0 0
    %132 = vmatpush.bf16.msra.mxu0 %v120
    %133 = vmatpush.bf16.msra.mxu0 %v119
    %134 = vmatmul.bf16.gmra.mxu0 %v124
    %v135 = vpop.f32.mrf.mxu0
    %v136 = vadd.f32 %v109, %v135
    %v137 = vpop.f32.mrf.mxu0
    %v138 = vadd.f32 %v109, %v137
    %139 = vdwg.mxu0
    %v140 = vpack.c.bf16 %v136, %v136
    %142 = vrot.lane.b32.xlu0 %v140, 96
    %v143 = vpop.permute.xlu0 %142
    %vm144 = vcmask 64512
    %v146 = vsel %vm144, %v140, 0
    %v149 = vsel %vm144, %v143, 0
    %151 = vmatpush.bf16.xpose.msra.mxu0 0
    %152 = vmatpush.bf16.xpose.msra.mxu0 0
    %153 = vmatpush.bf16.xpose.msra.mxu0 0
    %154 = vmatpush.bf16.xpose.msra.mxu0 0
    %155 = vmatpush.bf16.xpose.msra.mxu0 0
    %156 = vmatpush.bf16.xpose.msra.mxu0 0
    %157 = vmatpush.bf16.xpose.msra.mxu0 0
    %158 = vmatpush.bf16.xpose.msra.mxu0 %v149
    %159 = vmatmul.bf16.gmra.mxu0 %v146
    %v160 = vpop.f32.mrf.mxu0
    %v161 = vadd.f32 0.0, %v160
    %v162 = vpop.f32.mrf.mxu0
    %163 = vdwg.mxu0
    %v164 = vsel %vm144, %v161, -inf
    %165 = vmax.xlane.f32.xlu0 %v164
    %v166 = vpop.xlane.xlu0 %165
    %v167 = vsub.f32 %v161, %v166
    %v168 = vmul.f32 %v167, 1.442695
    %v169 = vpow.pop %v168
    %v170 = vsel %vm144, %v169, 0.0
    %171 = vadd.xlane.f32.xlu0 %v170
    %v172 = vpop.xlane.xlu0 %171
    %v173 = vrcp.pop %v172
    %v174 = vmul.f32 %v169, %v173
    %v175 = vpack.c.bf16 %v174, %v174
    %176 = vrot.lane.b32.xlu0 %v140, 64
    %v177 = vpop.permute.xlu0 %176
    %v179 = vsel %vm144, %v175, 0
    %vm181 = vcmask 1043456
    %v183 = vsel %vm181, %v177, 0
    %185 = vmatpush.bf16.msra.mxu0 0
    %186 = vmatpush.bf16.msra.mxu0 0
    %187 = vmatpush.bf16.msra.mxu0 0
    %188 = vmatpush.bf16.msra.mxu0 0
    %189 = vmatpush.bf16.msra.mxu0 0
    %190 = vmatpush.bf16.msra.mxu0 0
    %191 = vmatpush.bf16.msra.mxu0 0
    %192 = vmatpush.bf16.msra.mxu0 %v183
    %193 = vmatmul.bf16.gmra.mxu0 %v179
    %v194 = vpop.f32.mrf.mxu0
    %v195 = vadd.f32 0.0, %v194
    %v196 = vpop.f32.mrf.mxu0
    %197 = vdwg.mxu0
    %198 = vst.msk [vmem:[#allocation3] sm:$0xff] %vm144, %v195
    %v199 = vpack.c.bf16 %v138, %v138
    %201 = vrot.lane.b32.xlu0 %v199, 96
    %v202 = vpop.permute.xlu0 %201
    %v204 = vsel %vm144, %v199, 0
    %v207 = vsel %vm144, %v202, 0
    %209 = vmatpush.bf16.xpose.msra.mxu0 0
    %210 = vmatpush.bf16.xpose.msra.mxu0 0
    %211 = vmatpush.bf16.xpose.msra.mxu0 0
    %212 = vmatpush.bf16.xpose.msra.mxu0 0
    %213 = vmatpush.bf16.xpose.msra.mxu0 0
    %214 = vmatpush.bf16.xpose.msra.mxu0 0
    %215 = vmatpush.bf16.xpose.msra.mxu0 0
    %216 = vmatpush.bf16.xpose.msra.mxu0 %v207
    %217 = vmatmul.bf16.gmra.mxu0 %v204
    %v218 = vpop.f32.mrf.mxu0
    %v219 = vadd.f32 0.0, %v218
    %v220 = vpop.f32.mrf.mxu0
    %221 = vdwg.mxu0
    %v222 = vsel %vm144, %v219, -inf
    %223 = vmax.xlane.f32.xlu0 %v222
    %v224 = vpop.xlane.xlu0 %223
    %v225 = vsub.f32 %v219, %v224
    %v226 = vmul.f32 %v225, 1.442695
    %v227 = vpow.pop %v226
    %v228 = vsel %vm144, %v227, 0.0
    %229 = vadd.xlane.f32.xlu0 %v228
    %v230 = vpop.xlane.xlu0 %229
    %v231 = vrcp.pop %v230
    %v232 = vmul.f32 %v227, %v231
    %v233 = vpack.c.bf16 %v232, %v232
    %234 = vrot.lane.b32.xlu0 %v199, 64
    %v235 = vpop.permute.xlu0 %234
    %v237 = vsel %vm144, %v233, 0
    %v240 = vsel %vm181, %v235, 0
    %242 = vmatpush.bf16.msra.mxu0 0
    %243 = vmatpush.bf16.msra.mxu0 0
    %244 = vmatpush.bf16.msra.mxu0 0
    %245 = vmatpush.bf16.msra.mxu0 0
    %246 = vmatpush.bf16.msra.mxu0 0
    %247 = vmatpush.bf16.msra.mxu0 0
    %248 = vmatpush.bf16.msra.mxu0 0
    %249 = vmatpush.bf16.msra.mxu0 %v240
    %250 = vmatmul.bf16.gmra.mxu0 %v237
    %v251 = vpop.f32.mrf.mxu0
    %v252 = vadd.f32 0.0, %v251
    %v253 = vpop.f32.mrf.mxu0
    %254 = vdwg.mxu0
    %255 = vst.msk [vmem:[#allocation3 + $0x8] sm:$0xff] %vm144, %v252
    %256 = vrot.lane.b32.xlu0 %v140, 120
    %v257 = vpop.permute.xlu0 %256
    %258 = vrot.lane.b32.xlu0 %v140, 88
    %v259 = vpop.permute.xlu0 %258
    %v261 = vsel %vm144, %v257, 0
    %v264 = vsel %vm144, %v259, 0
    %266 = vmatpush.bf16.xpose.msra.mxu0 0
    %267 = vmatpush.bf16.xpose.msra.mxu0 0
    %268 = vmatpush.bf16.xpose.msra.mxu0 0
    %269 = vmatpush.bf16.xpose.msra.mxu0 0
    %270 = vmatpush.bf16.xpose.msra.mxu0 0
    %271 = vmatpush.bf16.xpose.msra.mxu0 0
    %272 = vmatpush.bf16.xpose.msra.mxu0 0
    %273 = vmatpush.bf16.xpose.msra.mxu0 %v264
    %274 = vmatmul.bf16.gmra.mxu0 %v261
    %v275 = vpop.f32.mrf.mxu0
    %v276 = vadd.f32 0.0, %v275
    %v277 = vpop.f32.mrf.mxu0
    %278 = vdwg.mxu0
    %v279 = vsel %vm144, %v276, -inf
    %280 = vmax.xlane.f32.xlu0 %v279
    %v281 = vpop.xlane.xlu0 %280
    %v282 = vsub.f32 %v276, %v281
    %v283 = vmul.f32 %v282, 1.442695
    %v284 = vpow.pop %v283
    %v285 = vsel %vm144, %v284, 0.0
    %286 = vadd.xlane.f32.xlu0 %v285
    %v287 = vpop.xlane.xlu0 %286
    %v288 = vrcp.pop %v287
    %v289 = vmul.f32 %v284, %v288
    %v290 = vpack.c.bf16 %v289, %v289
    %291 = vrot.lane.b32.xlu0 %v140, 56
    %v292 = vpop.permute.xlu0 %291
    %v294 = vsel %vm144, %v290, 0
    %v297 = vsel %vm181, %v292, 0
    %299 = vmatpush.bf16.msra.mxu0 0
    %300 = vmatpush.bf16.msra.mxu0 0
    %301 = vmatpush.bf16.msra.mxu0 0
    %302 = vmatpush.bf16.msra.mxu0 0
    %303 = vmatpush.bf16.msra.mxu0 0
    %304 = vmatpush.bf16.msra.mxu0 0
    %305 = vmatpush.bf16.msra.mxu0 0
    %306 = vmatpush.bf16.msra.mxu0 %v297
    %307 = vmatmul.bf16.gmra.mxu0 %v294
    %v308 = vpop.f32.mrf.mxu0
    %v309 = vadd.f32 0.0, %v308
    %v310 = vpop.f32.mrf.mxu0
    %311 = vdwg.mxu0
    %313 = vrot.lane.b32.xlu0 %v309, 8
    %v314 = vpop.permute.xlu0 %313
    %vm316 = vcmask 130112
    %317 = vst.msk [vmem:[#allocation3] sm:$0xff] %vm316, %v314
    %318 = vrot.lane.b32.xlu0 %v199, 120
    %v319 = vpop.permute.xlu0 %318
    %320 = vrot.lane.b32.xlu0 %v199, 88
    %v321 = vpop.permute.xlu0 %320
    %v323 = vsel %vm144, %v319, 0
    %v326 = vsel %vm144, %v321, 0
    %328 = vmatpush.bf16.xpose.msra.mxu0 0
    %329 = vmatpush.bf16.xpose.msra.mxu0 0
    %330 = vmatpush.bf16.xpose.msra.mxu0 0
    %331 = vmatpush.bf16.xpose.msra.mxu0 0
    %332 = vmatpush.bf16.xpose.msra.mxu0 0
    %333 = vmatpush.bf16.xpose.msra.mxu0 0
    %334 = vmatpush.bf16.xpose.msra.mxu0 0
    %335 = vmatpush.bf16.xpose.msra.mxu0 %v326
    %336 = vmatmul.bf16.gmra.mxu0 %v323
    %v337 = vpop.f32.mrf.mxu0
    %v338 = vadd.f32 0.0, %v337
    %v339 = vpop.f32.mrf.mxu0
    %340 = vdwg.mxu0
    %v341 = vsel %vm144, %v338, -inf
    %342 = vmax.xlane.f32.xlu0 %v341
    %v343 = vpop.xlane.xlu0 %342
    %v344 = vsub.f32 %v338, %v343
    %v345 = vmul.f32 %v344, 1.442695
    %v346 = vpow.pop %v345
    %v347 = vsel %vm144, %v346, 0.0
    %348 = vadd.xlane.f32.xlu0 %v347
    %v349 = vpop.xlane.xlu0 %348
    %v350 = vrcp.pop %v349
    %v351 = vmul.f32 %v346, %v350
    %v352 = vpack.c.bf16 %v351, %v351
    %353 = vrot.lane.b32.xlu0 %v199, 56
    %v354 = vpop.permute.xlu0 %353
    %v356 = vsel %vm144, %v352, 0
    %v359 = vsel %vm181, %v354, 0
    %361 = vmatpush.bf16.msra.mxu0 0
    %362 = vmatpush.bf16.msra.mxu0 0
    %363 = vmatpush.bf16.msra.mxu0 0
    %364 = vmatpush.bf16.msra.mxu0 0
    %365 = vmatpush.bf16.msra.mxu0 0
    %366 = vmatpush.bf16.msra.mxu0 0
    %367 = vmatpush.bf16.msra.mxu0 0
    %368 = vmatpush.bf16.msra.mxu0 %v359
    %369 = vmatmul.bf16.gmra.mxu0 %v356
    %v370 = vpop.f32.mrf.mxu0
    %v371 = vadd.f32 0.0, %v370
    %v372 = vpop.f32.mrf.mxu0
    %373 = vdwg.mxu0
    %375 = vrot.lane.b32.xlu0 %v371, 8
    %v376 = vpop.permute.xlu0 %375
    %378 = vst.msk [vmem:[#allocation3 + $0x8] sm:$0xff] %vm316, %v376
    %379 = vrot.lane.b32.xlu0 %v140, 112
    %v380 = vpop.permute.xlu0 %379
    %381 = vrot.lane.b32.xlu0 %v140, 80
    %v382 = vpop.permute.xlu0 %381
    %v384 = vsel %vm144, %v380, 0
    %v387 = vsel %vm144, %v382, 0
    %389 = vmatpush.bf16.xpose.msra.mxu0 0
    %390 = vmatpush.bf16.xpose.msra.mxu0 0
    %391 = vmatpush.bf16.xpose.msra.mxu0 0
    %392 = vmatpush.bf16.xpose.msra.mxu0 0
    %393 = vmatpush.bf16.xpose.msra.mxu0 0
    %394 = vmatpush.bf16.xpose.msra.mxu0 0
    %395 = vmatpush.bf16.xpose.msra.mxu0 0
    %396 = vmatpush.bf16.xpose.msra.mxu0 %v387
    %397 = vmatmul.bf16.gmra.mxu0 %v384
    %v398 = vpop.f32.mrf.mxu0
    %v399 = vadd.f32 0.0, %v398
    %v400 = vpop.f32.mrf.mxu0
    %401 = vdwg.mxu0
    %v402 = vsel %vm144, %v399, -inf
    %403 = vmax.xlane.f32.xlu0 %v402
    %v404 = vpop.xlane.xlu0 %403
    %v405 = vsub.f32 %v399, %v404
    %v406 = vmul.f32 %v405, 1.442695
    %v407 = vpow.pop %v406
    %v408 = vsel %vm144, %v407, 0.0
    %409 = vadd.xlane.f32.xlu0 %v408
    %v410 = vpop.xlane.xlu0 %409
    %v411 = vrcp.pop %v410
    %v412 = vmul.f32 %v407, %v411
    %v413 = vpack.c.bf16 %v412, %v412
    %414 = vrot.lane.b32.xlu0 %v140, 48
    %v415 = vpop.permute.xlu0 %414
    %v417 = vsel %vm144, %v413, 0
    %v420 = vsel %vm181, %v415, 0
    %422 = vmatpush.bf16.msra.mxu0 0
    %423 = vmatpush.bf16.msra.mxu0 0
    %424 = vmatpush.bf16.msra.mxu0 0
    %425 = vmatpush.bf16.msra.mxu0 0
    %426 = vmatpush.bf16.msra.mxu0 0
    %427 = vmatpush.bf16.msra.mxu0 0
    %428 = vmatpush.bf16.msra.mxu0 0
    %429 = vmatpush.bf16.msra.mxu0 %v420
    %430 = vmatmul.bf16.gmra.mxu0 %v417
    %v431 = vpop.f32.mrf.mxu0
    %v432 = vadd.f32 0.0, %v431
    %v433 = vpop.f32.mrf.mxu0
    %434 = vdwg.mxu0
    %436 = vrot.lane.b32.xlu0 %v432, 16
    %v437 = vpop.permute.xlu0 %436
    %vm439 = vcmask 195712
    %440 = vst.msk [vmem:[#allocation3] sm:$0xff] %vm439, %v437
    %441 = vrot.lane.b32.xlu0 %v199, 112
    %v442 = vpop.permute.xlu0 %441
    %443 = vrot.lane.b32.xlu0 %v199, 80
    %v444 = vpop.permute.xlu0 %443
    %v446 = vsel %vm144, %v442, 0
    %v449 = vsel %vm144, %v444, 0
    %451 = vmatpush.bf16.xpose.msra.mxu0 0
    %452 = vmatpush.bf16.xpose.msra.mxu0 0
    %453 = vmatpush.bf16.xpose.msra.mxu0 0
    %454 = vmatpush.bf16.xpose.msra.mxu0 0
    %455 = vmatpush.bf16.xpose.msra.mxu0 0
    %456 = vmatpush.bf16.xpose.msra.mxu0 0
    %457 = vmatpush.bf16.xpose.msra.mxu0 0
    %458 = vmatpush.bf16.xpose.msra.mxu0 %v449
    %459 = vmatmul.bf16.gmra.mxu0 %v446
    %v460 = vpop.f32.mrf.mxu0
    %v461 = vadd.f32 0.0, %v460
    %v462 = vpop.f32.mrf.mxu0
    %463 = vdwg.mxu0
    %v464 = vsel %vm144, %v461, -inf
    %465 = vmax.xlane.f32.xlu0 %v464
    %v466 = vpop.xlane.xlu0 %465
    %v467 = vsub.f32 %v461, %v466
    %v468 = vmul.f32 %v467, 1.442695
    %v469 = vpow.pop %v468
    %v470 = vsel %vm144, %v469, 0.0
    %471 = vadd.xlane.f32.xlu0 %v470
    %v472 = vpop.xlane.xlu0 %471
    %v473 = vrcp.pop %v472
    %v474 = vmul.f32 %v469, %v473
    %v475 = vpack.c.bf16 %v474, %v474
    %476 = vrot.lane.b32.xlu0 %v199, 48
    %v477 = vpop.permute.xlu0 %476
    %v479 = vsel %vm144, %v475, 0
    %v482 = vsel %vm181, %v477, 0
    %484 = vmatpush.bf16.msra.mxu0 0
    %485 = vmatpush.bf16.msra.mxu0 0
    %486 = vmatpush.bf16.msra.mxu0 0
    %487 = vmatpush.bf16.msra.mxu0 0
    %488 = vmatpush.bf16.msra.mxu0 0
    %489 = vmatpush.bf16.msra.mxu0 0
    %490 = vmatpush.bf16.msra.mxu0 0
    %491 = vmatpush.bf16.msra.mxu0 %v482
    %492 = vmatmul.bf16.gmra.mxu0 %v479
    %v493 = vpop.f32.mrf.mxu0
    %v494 = vadd.f32 0.0, %v493
    %v495 = vpop.f32.mrf.mxu0
    %496 = vdwg.mxu0
    %498 = vrot.lane.b32.xlu0 %v494, 16
    %v499 = vpop.permute.xlu0 %498
    %501 = vst.msk [vmem:[#allocation3 + $0x8] sm:$0xff] %vm439, %v499
    %502 = vrot.lane.b32.xlu0 %v140, 104
    %v503 = vpop.permute.xlu0 %502
    %504 = vrot.lane.b32.xlu0 %v140, 72
    %v505 = vpop.permute.xlu0 %504
    %v507 = vsel %vm144, %v503, 0
    %v510 = vsel %vm144, %v505, 0
    %512 = vmatpush.bf16.xpose.msra.mxu0 0
    %513 = vmatpush.bf16.xpose.msra.mxu0 0
    %514 = vmatpush.bf16.xpose.msra.mxu0 0
    %515 = vmatpush.bf16.xpose.msra.mxu0 0
    %516 = vmatpush.bf16.xpose.msra.mxu0 0
    %517 = vmatpush.bf16.xpose.msra.mxu0 0
    %518 = vmatpush.bf16.xpose.msra.mxu0 0
    %519 = vmatpush.bf16.xpose.msra.mxu0 %v510
    %520 = vmatmul.bf16.gmra.mxu0 %v507
    %v521 = vpop.f32.mrf.mxu0
    %v522 = vadd.f32 0.0, %v521
    %v523 = vpop.f32.mrf.mxu0
    %524 = vdwg.mxu0
    %v525 = vsel %vm144, %v522, -inf
    %526 = vmax.xlane.f32.xlu0 %v525
    %v527 = vpop.xlane.xlu0 %526
    %v528 = vsub.f32 %v522, %v527
    %v529 = vmul.f32 %v528, 1.442695
    %v530 = vpow.pop %v529
    %v531 = vsel %vm144, %v530, 0.0
    %532 = vadd.xlane.f32.xlu0 %v531
    %v533 = vpop.xlane.xlu0 %532
    %v534 = vrcp.pop %v533
    %v535 = vmul.f32 %v530, %v534
    %v536 = vpack.c.bf16 %v535, %v535
    %537 = vrot.lane.b32.xlu0 %v140, 40
    %v538 = vpop.permute.xlu0 %537
    %v540 = vsel %vm144, %v536, 0
    %v543 = vsel %vm181, %v538, 0
    %545 = vmatpush.bf16.msra.mxu0 0
    %546 = vmatpush.bf16.msra.mxu0 0
    %547 = vmatpush.bf16.msra.mxu0 0
    %548 = vmatpush.bf16.msra.mxu0 0
    %549 = vmatpush.bf16.msra.mxu0 0
    %550 = vmatpush.bf16.msra.mxu0 0
    %551 = vmatpush.bf16.msra.mxu0 0
    %552 = vmatpush.bf16.msra.mxu0 %v543
    %553 = vmatmul.bf16.gmra.mxu0 %v540
    %v554 = vpop.f32.mrf.mxu0
    %v555 = vadd.f32 0.0, %v554
    %v556 = vpop.f32.mrf.mxu0
    %557 = vdwg.mxu0
    %559 = vrot.lane.b32.xlu0 %v555, 24
    %v560 = vpop.permute.xlu0 %559
    %vm562 = vcmask 261312
    %563 = vst.msk [vmem:[#allocation3] sm:$0xff] %vm562, %v560
    %564 = vrot.lane.b32.xlu0 %v199, 104
    %v565 = vpop.permute.xlu0 %564
    %566 = vrot.lane.b32.xlu0 %v199, 72
    %v567 = vpop.permute.xlu0 %566
    %v569 = vsel %vm144, %v565, 0
    %v572 = vsel %vm144, %v567, 0
    %574 = vmatpush.bf16.xpose.msra.mxu0 0
    %575 = vmatpush.bf16.xpose.msra.mxu0 0
    %576 = vmatpush.bf16.xpose.msra.mxu0 0
    %577 = vmatpush.bf16.xpose.msra.mxu0 0
    %578 = vmatpush.bf16.xpose.msra.mxu0 0
    %579 = vmatpush.bf16.xpose.msra.mxu0 0
    %580 = vmatpush.bf16.xpose.msra.mxu0 0
    %581 = vmatpush.bf16.xpose.msra.mxu0 %v572
    %582 = vmatmul.bf16.gmra.mxu0 %v569
    %v583 = vpop.f32.mrf.mxu0
    %v584 = vadd.f32 0.0, %v583
    %v585 = vpop.f32.mrf.mxu0
    %586 = vdwg.mxu0
    %v587 = vsel %vm144, %v584, -inf
    %588 = vmax.xlane.f32.xlu0 %v587
    %v589 = vpop.xlane.xlu0 %588
    %v590 = vsub.f32 %v584, %v589
    %v591 = vmul.f32 %v590, 1.442695
    %v592 = vpow.pop %v591
    %v593 = vsel %vm144, %v592, 0.0
    %594 = vadd.xlane.f32.xlu0 %v593
    %v595 = vpop.xlane.xlu0 %594
    %v596 = vrcp.pop %v595
    %v597 = vmul.f32 %v592, %v596
    %v598 = vpack.c.bf16 %v597, %v597
    %599 = vrot.lane.b32.xlu0 %v199, 40
    %v600 = vpop.permute.xlu0 %599
    %v602 = vsel %vm144, %v598, 0
    %v605 = vsel %vm181, %v600, 0
    %607 = vmatpush.bf16.msra.mxu0 0
    %608 = vmatpush.bf16.msra.mxu0 0
    %609 = vmatpush.bf16.msra.mxu0 0
    %610 = vmatpush.bf16.msra.mxu0 0
    %611 = vmatpush.bf16.msra.mxu0 0
    %612 = vmatpush.bf16.msra.mxu0 0
    %613 = vmatpush.bf16.msra.mxu0 0
    %614 = vmatpush.bf16.msra.mxu0 %v605
    %615 = vmatmul.bf16.gmra.mxu0 %v602
    %v616 = vpop.f32.mrf.mxu0
    %v617 = vadd.f32 0.0, %v616
    %v618 = vpop.f32.mrf.mxu0
    %619 = vdwg.mxu0
    %621 = vrot.lane.b32.xlu0 %v617, 24
    %v622 = vpop.permute.xlu0 %621
    %624 = vst.msk [vmem:[#allocation3 + $0x8] sm:$0xff] %vm562, %v622
    %v625 = vld [vmem:[#allocation3] sm:$0xff]
    %v626 = vld [vmem:[#allocation3 + $0x8] sm:$0xff]
    %v627 = vpack.c.bf16 %v626, %v625
    %v628 = vld [vmem:[%s4] sm:$0xf]
    %v629 = vld [vmem:[%s4 + $0x4] sm:$0xf]
    %v630 = vld [vmem:[%s4 + $0x8] sm:$0xf]
    %v631 = vld [vmem:[%s4 + $0xc] sm:$0xf]
    %v636 = vunpack.c.l.b16 %v628
    %v637 = vunpack.c.l.b16 %v629
    %v638 = vunpack.c.l.b16 %v630
    %v639 = vunpack.c.l.b16 %v631
    %v640 = vpack.c.b16 %v637, %v636
    %v641 = vpack.c.b16 %v639, %v638
    %v645 = vsel %vm44, %v627, 0
    %647 = vmatpush.bf16.msra.mxu0 0
    %648 = vmatpush.bf16.msra.mxu0 0
    %649 = vmatpush.bf16.msra.mxu0 0
    %650 = vmatpush.bf16.msra.mxu0 0
    %651 = vmatpush.bf16.msra.mxu0 0
    %652 = vmatpush.bf16.msra.mxu0 0
    %653 = vmatpush.bf16.msra.mxu0 %v641
    %654 = vmatpush.bf16.msra.mxu0 %v640
    %655 = vmatmul.bf16.gmra.mxu0 %v645
    %v656 = vpop.f32.mrf.mxu0
    %v657 = vadd.f32 0.0, %v656
    %v658 = vpop.f32.mrf.mxu0
    %v659 = vadd.f32 0.0, %v658
    %660 = vdwg.mxu0
    %v661 = vadd.f32 %v41, %v657
    %v662 = vadd.f32 %v42, %v659
    %v663 = vperm.slane %v43, 2
    %v664 = vadd.f32 %v661, %v663
    %v665 = vadd.f32 %v662, %v663
    %v666 = vsel %vm44, %v664, 0.0
    %667 = vadd.xlane.f32.xlu0 %v666
    %v668 = vpop.xlane.xlu0 %667
    %v669 = vsel %vm44, %v665, 0.0
    %670 = vadd.xlane.f32.xlu0 %v669
    %v671 = vpop.xlane.xlu0 %670
    %v672 = vmul.f32 %v668, %v57
    %v673 = vmul.f32 %v671, %v57
    %v674 = vsub.f32 %v664, %v672
    %v675 = vsub.f32 %v665, %v673
    %v676 = vmul.f32 %v674, %v674
    %v677 = vmul.f32 %v675, %v675
    %v678 = vsel %vm44, %v676, 0.0
    %679 = vadd.xlane.f32.xlu0 %v678
    %v680 = vpop.xlane.xlu0 %679
    %v681 = vsel %vm44, %v677, 0.0
    %682 = vadd.xlane.f32.xlu0 %v681
    %v683 = vpop.xlane.xlu0 %682
    %v684 = vmul.f32 %v680, %v57
    %v685 = vmul.f32 %v683, %v57
    %v686 = vadd.f32 %v684, 1e-05
    %v687 = vadd.f32 %v685, 1e-05
    %v688 = vrsqrt.pop %v686
    %v689 = vmul.f32 %v688, %v686
    %v690 = vmul.f32 %v689, %v688
    %v691 = vmul.f32 0.5, %v690
    %v692 = vsub.f32 1.5, %v691
    %v693 = vmul.f32 %v688, %v692
    %vm694 = vweird.f32 %v686
    %vm695 = vweird.f32 %v688
    %vm696 = vmor %vm694, %vm695
    %v697 = vsel %vm696, %v688, %v693
    %v698 = vrsqrt.pop %v687
    %v699 = vmul.f32 %v698, %v687
    %v700 = vmul.f32 %v699, %v698
    %v701 = vmul.f32 0.5, %v700
    %v702 = vsub.f32 1.5, %v701
    %v703 = vmul.f32 %v698, %v702
    %vm704 = vweird.f32 %v687
    %vm705 = vweird.f32 %v698
    %vm706 = vmor %vm704, %vm705
    %v707 = vsel %vm706, %v698, %v703
    %v708 = vmul.f32 %v674, %v697
    %v709 = vmul.f32 %v675, %v707
    %v710 = vperm.slane %v43, 3
    %v711 = vmul.f32 %v708, %v710
    %v712 = vmul.f32 %v709, %v710
    %v713 = vperm.slane %v43, 4
    %v714 = vadd.f32 %v711, %v713
    %v715 = vadd.f32 %v712, %v713
    %v716 = vpack.c.bf16 %v715, %v714
    %v717 = vld [vmem:[%s5] sm:$0xf]
    %v718 = vld [vmem:[%s5 + $0x4] sm:$0xf]
    %v719 = vld [vmem:[%s5 + $0x8] sm:$0xf]
    %v720 = vld [vmem:[%s5 + $0xc] sm:$0xf]
    %v721 = vld [vmem:[%s6] sm:$0x1]
    %v723 = vperm.slane %v721, 0
    %v729 = vunpack.c.l.b16 %v717
    %v730 = vunpack.c.l.b16 %v718
    %v731 = vunpack.c.l.b16 %v719
    %v732 = vunpack.c.l.b16 %v720
    %v733 = vpack.c.b16 %v730, %v729
    %v734 = vpack.c.b16 %v732, %v731
    %v738 = vsel %vm44, %v716, 0
    %740 = vmatpush.bf16.msra.mxu0 0
    %741 = vmatpush.bf16.msra.mxu0 0
    %742 = vmatpush.bf16.msra.mxu0 0
    %743 = vmatpush.bf16.msra.mxu0 0
    %744 = vmatpush.bf16.msra.mxu0 0
    %745 = vmatpush.bf16.msra.mxu0 0
    %746 = vmatpush.bf16.msra.mxu0 %v734
    %747 = vmatpush.bf16.msra.mxu0 %v733
    %748 = vmatmul.bf16.gmra.mxu0 %v738
    %v749 = vpop.f32.mrf.mxu0
    %v750 = vadd.f32 %v723, %v749
    %v751 = vpop.f32.mrf.mxu0
    %v752 = vadd.f32 %v723, %v751
    %753 = vdwg.mxu0
    %v754 = vmul.f32 %v750, 0.5
    %v755 = vmul.f32 %v752, 0.5
    %v756 = vmul.f32 %v750, 0.70710677
    %v757 = vmul.f32 %v752, 0.70710677
    %v758 = vmul.f32 %v756, %v756
    %v759 = vmin.f32 16.0, %v758
    %v760 = vmul.f32 %v759, 2.1237322e-06
    %v761 = vadd.f32 %v760, 0.00028619796
    %v762 = vmul.f32 %v759, %v761
    %v763 = vadd.f32 %v762, 0.0036580483
    %v764 = vmul.f32 %v759, %v763
    %v765 = vadd.f32 %v764, 0.05243302
    %v766 = vmul.f32 %v759, %v765
    %v767 = vadd.f32 %v766, 0.18741608
    %v768 = vmul.f32 %v759, %v767
    %v769 = vadd.f32 %v768, 1.1283791
    %v770 = vmul.f32 %v756, %v769
    %v771 = vmul.f32 %v759, 3.8918573e-05
    %v772 = vadd.f32 %v771, 0.001143296
    %v773 = vmul.f32 %v759, %v772
    %v774 = vadd.f32 %v773, 0.014752088
    %v775 = vmul.f32 %v759, %v774
    %v776 = vadd.f32 %v775, 0.112945676
    %v777 = vmul.f32 %v759, %v776
    %v778 = vadd.f32 %v777, 0.4994258
    %v779 = vmul.f32 %v759, %v778
    %v780 = vadd.f32 %v779, 1.0
    %v781 = vrcp.pop %v780
    %v782 = vmul.f32 %v780, %v781
    %v783 = vsub.f32 1.0, %v782
    %v784 = vmul.f32 %v781, %v783
    %v785 = vadd.f32 %v781, %v784
    %vm786 = vweird.f32 %v780
    %vm787 = vweird.f32 %v781
    %vm788 = vmor %vm786, %vm787
    %v789 = vsel %vm788, %v781, %v785
    %v790 = vand.u32 2147483647, %v780
    %vm791 = vcmp.eq.f32.partialorder %v790, 8.507059e+37
    %v792 = vand.u32 %v780, 2147483648
    %v793 = vor.u32 1.1754944e-38, %v792
    %v794 = vsel %vm791, %v793, %v789
    %v795 = vmul.f32 %v770, %v794
    %v796 = vmin.f32 %v795, 1.0
    %v797 = vmax.f32 %v796, -1.0
    %v798 = vmul.f32 %v757, %v757
    %v799 = vmin.f32 16.0, %v798
    %v800 = vmul.f32 %v799, 2.1237322e-06
    %v801 = vadd.f32 %v800, 0.00028619796
    %v802 = vmul.f32 %v799, %v801
    %v803 = vadd.f32 %v802, 0.0036580483
    %v804 = vmul.f32 %v799, %v803
    %v805 = vadd.f32 %v804, 0.05243302
    %v806 = vmul.f32 %v799, %v805
    %v807 = vadd.f32 %v806, 0.18741608
    %v808 = vmul.f32 %v799, %v807
    %v809 = vadd.f32 %v808, 1.1283791
    %v810 = vmul.f32 %v757, %v809
    %v811 = vmul.f32 %v799, 3.8918573e-05
    %v812 = vadd.f32 %v811, 0.001143296
    %v813 = vmul.f32 %v799, %v812
    %v814 = vadd.f32 %v813, 0.014752088
    %v815 = vmul.f32 %v799, %v814
    %v816 = vadd.f32 %v815, 0.112945676
    %v817 = vmul.f32 %v799, %v816
    %v818 = vadd.f32 %v817, 0.4994258
    %v819 = vmul.f32 %v799, %v818
    %v820 = vadd.f32 %v819, 1.0
    %v821 = vrcp.pop %v820
    %v822 = vmul.f32 %v820, %v821
    %v823 = vsub.f32 1.0, %v822
    %v824 = vmul.f32 %v821, %v823
    %v825 = vadd.f32 %v821, %v824
    %vm826 = vweird.f32 %v820
    %vm827 = vweird.f32 %v821
    %vm828 = vmor %vm826, %vm827
    %v829 = vsel %vm828, %v821, %v825
    %v830 = vand.u32 2147483647, %v820
    %vm831 = vcmp.eq.f32.partialorder %v830, 8.507059e+37
    %v832 = vand.u32 %v820, 2147483648
    %v833 = vor.u32 1.1754944e-38, %v832
    %v834 = vsel %vm831, %v833, %v829
    %v835 = vmul.f32 %v810, %v834
    %v836 = vmin.f32 %v835, 1.0
    %v837 = vmax.f32 %v836, -1.0
    %v838 = vadd.f32 %v797, 1.0
    %v839 = vadd.f32 %v837, 1.0
    %v840 = vmul.f32 %v754, %v838
    %v841 = vmul.f32 %v755, %v839
    %v842 = vpack.c.bf16 %v841, %v840
    %v843 = vld [vmem:[%s7] sm:$0xf]
    %v844 = vld [vmem:[%s7 + $0x4] sm:$0xf]
    %v845 = vld [vmem:[%s7 + $0x8] sm:$0xf]
    %v846 = vld [vmem:[%s7 + $0xc] sm:$0xf]
    %v847 = vld [vmem:[%s7 + $0x10] sm:$0xf]
    %v848 = vld [vmem:[%s7 + $0x14] sm:$0xf]
    %v849 = vld [vmem:[%s7 + $0x18] sm:$0xf]
    %v850 = vld [vmem:[%s7 + $0x1c] sm:$0xf]
    %v851 = vld [vmem:[%s7 + $0x20] sm:$0xf]
    %v852 = vld [vmem:[%s7 + $0x24] sm:$0xf]
    %v853 = vld [vmem:[%s7 + $0x28] sm:$0xf]
    %v854 = vld [vmem:[%s7 + $0x2c] sm:$0xf]
    %v855 = vld [vmem:[%s7 + $0x30] sm:$0xf]
    %v856 = vld [vmem:[%s7 + $0x34] sm:$0xf]
    %v857 = vld [vmem:[%s7 + $0x38] sm:$0xf]
    %v858 = vld [vmem:[%s7 + $0x3c] sm:$0xf]
    %v859 = vperm.slane %v43, 5
    %v876 = vunpack.c.l.b16 %v843
    %v877 = vunpack.c.l.b16 %v844
    %v878 = vunpack.c.l.b16 %v845
    %v879 = vunpack.c.l.b16 %v846
    %v880 = vunpack.c.l.b16 %v847
    %v881 = vunpack.c.l.b16 %v848
    %v882 = vunpack.c.l.b16 %v849
    %v883 = vunpack.c.l.b16 %v850
    %v884 = vunpack.c.l.b16 %v851
    %v885 = vunpack.c.l.b16 %v852
    %v886 = vunpack.c.l.b16 %v853
    %v887 = vunpack.c.l.b16 %v854
    %v888 = vunpack.c.l.b16 %v855
    %v889 = vunpack.c.l.b16 %v856
    %v890 = vunpack.c.l.b16 %v857
    %v891 = vunpack.c.l.b16 %v858
    %v892 = vpack.c.b16 %v877, %v876
    %v893 = vpack.c.b16 %v879, %v878
    %v894 = vpack.c.b16 %v881, %v880
    %v895 = vpack.c.b16 %v883, %v882
    %v896 = vpack.c.b16 %v885, %v884
    %v897 = vpack.c.b16 %v887, %v886
    %v898 = vpack.c.b16 %v889, %v888
    %v899 = vpack.c.b16 %v891, %v890
    %908 = vmatpush.bf16.msra.mxu0 %v899
    %909 = vmatpush.bf16.msra.mxu0 %v898
    %910 = vmatpush.bf16.msra.mxu0 %v897
    %911 = vmatpush.bf16.msra.mxu0 %v896
    %912 = vmatpush.bf16.msra.mxu0 %v895
    %913 = vmatpush.bf16.msra.mxu0 %v894
    %914 = vmatpush.bf16.msra.mxu0 %v893
    %915 = vmatpush.bf16.msra.mxu0 %v892
    %916 = vmatmul.bf16.gmra.mxu0 %v842
    %v917 = vpop.f32.mrf.mxu0
    %v918 = vadd.f32 %v859, %v917
    %v919 = vpop.f32.mrf.mxu0
    %v920 = vadd.f32 %v859, %v919
    %921 = vdwg.mxu0
    %v922 = vadd.f32 %v664, %v918
    %v923 = vadd.f32 %v665, %v920
    %924 = vst.msk [vmem:[#allocation2] sm:$0xff] %vm44, %v922
    %925 = vst.msk [vmem:[#allocation2 + $0x8] sm:$0xff] %vm44, %v923
    // Predicated region
    $region38: #{tpu_custom_call.1} parent=1 // pred_check
      %p926 = pneg %p31
    $region39: #{tpu_custom_call.1} parent=1 // pred_check_branch
      %928 = sbr.rel (%p926) target = $region41
    $region40: #{tpu_custom_call.1} parent=1 // pred_region
      %v929 = vld [vmem:[#allocation2] ss:$2 sm:$0xff]
      %s930 = scalar_lea.vmem [#allocation2], 1
      %v931 = vld [vmem:[%s930] ss:$2 sm:$0xff]
      %v932 = vadd.f32 %v929, %v931
      %vm933 = vcmask 257024
      %934 = vst.msk [vmem:[#allocation4] sm:$0xf] %vm933, %v932
      %s935 = scalar_lea.vmem [#allocation4], 4
      %vm936 = vcmask 261124
      %937 = vst.msk [vmem:[%s935 - $0x4] sm:$0xf0] %vm936, %v932
    $region41: #{tpu_custom_call.1} parent=1 // pred_fallthru
      _
    // Predicated region
    $region42: #{tpu_custom_call.1} parent=1 // pred_check
      _
    $region43: #{tpu_custom_call.1} parent=1 // pred_check_branch
      %939 = sbr.rel (0) target = $region45
    $region44: #{tpu_custom_call.1} parent=1 // pred_region
      %941 = vsyncadd [#allocation5], 0
      %s942 = sshll.u32 [#allocation4], 4
      %s943 = int_to_ptr.vmem [resolvable:$true] %s942
      %s944 = sshll.u32 %s8, 4
      %s945 = int_to_ptr.hbm [resolvable:$true] %s944
      %950 = dma.vmem_to_hbm [thread:$0]  %s943, 128, %s945, [#allocation5], 64, 64, 4
    $region45: #{tpu_custom_call.1} parent=1 // pred_fallthru
      _
    // Predicated region
    $region46: #{tpu_custom_call.1} parent=1 // pred_check
      _
    $region47: #{tpu_custom_call.1} parent=1 // pred_check_branch
      %952 = sbr.rel (0) target = $region49
    $region48: #{tpu_custom_call.1} parent=1 // pred_region
      %954 = dma.done [#allocation5], 128
    $region49: #{tpu_custom_call.1} parent=1 // pred_fallthru
      _
    %955 = vsyncpa [#allocation5], 1

</llo_original>
